<compile_context>
chip_gen: v6e
topology: v6e:2x2x1
jax: 0.10.0
libtpu: 0.0.40
codegen_flags: <defaults>
</compile_context>

<pallas_src>
import numpy as np
import jax
import jax.numpy as jnp
from jax.experimental import pallas as pl
from jax.experimental.pallas import tpu as pltpu

EMB_DIM = 32                      # emb_dim (kept small)
W2V_HIDDEN = 768                  # wav2vec2-base hidden size
FC_HIDDEN = 400
N_CLASSES = 100
INPUTS_TO_LOGITS_RATIO = 320      # product of wav2vec2-base conv strides
MASK_LENGTH = 10
MIN_INPUT_LENGTH = INPUTS_TO_LOGITS_RATIO * MASK_LENGTH * 2   # 6400

# Lane-dense (128-multiple) sizes used inside the kernel.
POOL_PAD = 384                    # 320 -> 3 * 128
FC_PAD = 512
NC_PAD = 128
EMB_PAD = 128
MAX_B_TILE = 256                  # fills v6e/v7x 256x256 MXU rows
_NEG = -1e9                       # bias for padded class logits -> exp() == 0


def _round_up(a, m):
    return pl.cdiv(a, m) * m


def _gelu(x):
    # TODO(synk): torch nn.GELU() default is erf-exact; tanh approximation used
    # (max abs deviation ~1e-3) to stay within guaranteed Mosaic elementwise ops.
    return jax.nn.gelu(x, approximate=True)


def cide_kernel(pooled_ref, wf_ref, w1_ref, b1_ref, w2_ref, b2_ref,
                emb_ref, wa1_ref, ba1_ref, wa2_ref, ba2_ref, gamma_ref,
                out_ref):
    # pooled_ref: (Bt, 384) f32 -- conv'd, padded, framed, frame-mean-pooled
    # waveform (computed in the wrapper); padded lanes 320..383 are zero.

    # ---- Surrogate wav2vec2 encoder + temporal mean (linear => pooled first) ----
    hid = jnp.dot(pooled_ref[...].astype(jnp.bfloat16), wf_ref[...],
                  preferred_element_type=jnp.float32)            # (Bt, 768)

    # ---- self.fc: Linear(768,400) -> GELU -> Linear(400,100)  (lane-padded) ----
    h = jnp.dot(hid.astype(jnp.bfloat16), w1_ref[...],
                preferred_element_type=jnp.float32) + b1_ref[...]
    h = _gelu(h)                                                 # (Bt, 512), pad cols 0
    logits = jnp.dot(h.astype(jnp.bfloat16), w2_ref[...],
                     preferred_element_type=jnp.float32) + b2_ref[...]   # (Bt, 128)

    # ---- self.m = Softmax(dim=1): padded classes biased by -1e9 -> prob 0 ----
    m = jnp.max(logits, axis=1, keepdims=True)
    e = jnp.exp(logits - m)
    probs = e / jnp.sum(e, axis=1, keepdims=True)                # exact reciprocal

    # ---- class_probs @ embeddings ----
    ce = jnp.dot(probs.astype(jnp.bfloat16), emb_ref[...],
                 preferred_element_type=jnp.float32)             # (Bt, 128)

    # ---- EmbeddingAdapter (ECoDepth form): ce + gamma * MLP(ce) ----
    t = jnp.dot(ce.astype(jnp.bfloat16), wa1_ref[...],
                preferred_element_type=jnp.float32) + ba1_ref[...]
    t = _gelu(t)
    t = jnp.dot(t.astype(jnp.bfloat16), wa2_ref[...],
                preferred_element_type=jnp.float32) + ba2_ref[...]
    out_ref[...] = ce + gamma_ref[...] * t                       # (Bt, 128) lane-dense


def cide_forward(x, kp):
    """x: (B, 2, T) float32 waveform. Returns (B, 1, EMB_DIM)."""
    B, C, T = x.shape
    assert C == 2
    T_eff = max(T, MIN_INPUT_LENGTH)                 # F.pad(x, (0, pad)) semantics
    S = T_eff // INPUTS_TO_LOGITS_RATIO              # number of surrogate frames
    L = S * INPUTS_TO_LOGITS_RATIO                   # samples covered by frames
    T_valid = min(T, L)                              # positions with real conv output

    # ---- Conv1d(2->1,k=1) + pad + framing + mean(dim=frames), fused in XLA ----
    # Padded positions are zero AFTER the conv, so the conv bias only applies to
    # valid positions: pooled = (cw0*mean(x0) + cw1*mean(x1)) + cbias*valid_frac.
    xv = jnp.pad(x[:, :, :T_valid].astype(jnp.float32),
                 ((0, 0), (0, 0), (0, L - T_valid)))
    ch_mean = jnp.mean(xv.reshape(B, 2, S, INPUTS_TO_LOGITS_RATIO), axis=2)  # (B,2,320)
    pos = np.arange(L, dtype=np.int64).reshape(S, INPUTS_TO_LOGITS_RATIO)
    vfrac = jnp.asarray((pos < T_valid).sum(axis=0).astype(np.float32) / float(S))
    pooled = (kp["conv_w"][0, 0] * ch_mean[:, 0]
              + kp["conv_w"][0, 1] * ch_mean[:, 1]
              + kp["conv_b"][0, 0] * vfrac)                       # (B, 320)

    # ---- Batch tiling: big MXU tiles, >= 2 grid steps when possible (v7x) ----
    B8 = _round_up(B, 8)
    if B8 >= 16:
        n_steps = max(2, pl.cdiv(B8, MAX_B_TILE))
        b_tile = min(MAX_B_TILE, _round_up(pl.cdiv(B8, n_steps), 8))
    else:
        b_tile = B8
    B_pad = _round_up(B8, b_tile)

    pooled_p = jnp.zeros((B_pad, POOL_PAD), jnp.float32)
    pooled_p = pooled_p.at[:B, :INPUTS_TO_LOGITS_RATIO].set(pooled)

    vmem = pl.BlockSpec(memory_space=pltpu.MemorySpace.VMEM)

    out = pl.pallas_call(
        cide_kernel,
        out_shape=jax.ShapeDtypeStruct((B_pad, EMB_PAD), jnp.float32),
        grid=(B_pad // b_tile,),
        in_specs=[
            pl.BlockSpec((b_tile, POOL_PAD), lambda i: (i, 0)),   # pooled (batch-tiled)
            vmem, vmem, vmem, vmem, vmem,                         # w_feat, w1, b1, w2, b2
            vmem, vmem, vmem, vmem, vmem, vmem,                   # emb, wa1, ba1, wa2, ba2, gamma
        ],
        out_specs=pl.BlockSpec((b_tile, EMB_PAD), lambda i: (i, 0)),
        compiler_params=pltpu.CompilerParams(
            dimension_semantics=("parallel",)),                   # megacore batch split
    )(pooled_p, kp["w_feat"], kp["w1"], kp["b1"], kp["w2"], kp["b2"],
      kp["embeddings"], kp["wa1"], kp["ba1"], kp["wa2"], kp["ba2"], kp["gamma"])

    # Drop batch / lane padding; EmbeddingAdapter also expands 'n c -> n 1 c'.
    return out[:B, :EMB_DIM][:, None, :]


def init_params(key, emb_dim=EMB_DIM):
    """Logical (unpadded, f32) parameters mirroring the PyTorch module."""
    ks = jax.random.split(key, 9)

    def dense(k, fan_in, fan_out):
        lim = 1.0 / np.sqrt(fan_in)
        return jax.random.uniform(k, (fan_in, fan_out), jnp.float32, -lim, lim)

    return dict(
        conv_w=jax.random.normal(ks[0], (1, 2), jnp.float32) * 0.5,
        conv_b=jnp.full((1, 1), 0.1, jnp.float32),
        # TODO(synk): pretrained 'facebook/wav2vec2-base-960h' transformer is not
        # re-implemented; substituted with a frozen deterministic per-frame linear
        # projection (frame = inputs_to_logits_ratio = 320 samples -> 768 dims).
        w_feat=jax.random.normal(ks[1], (INPUTS_TO_LOGITS_RATIO, W2V_HIDDEN),
                                 jnp.float32) / np.sqrt(INPUTS_TO_LOGITS_RATIO),
        w1=dense(ks[2], W2V_HIDDEN, FC_HIDDEN),
        b1=jax.random.uniform(ks[3], (1, FC_HIDDEN), jnp.float32, -0.05, 0.05),
        w2=dense(ks[4], FC_HIDDEN, N_CLASSES),
        b2=jax.random.uniform(ks[5], (1, N_CLASSES), jnp.float32, -0.05, 0.05),
        embeddings=jax.random.normal(ks[6], (N_CLASSES, emb_dim), jnp.float32),
        wa1=dense(ks[7], emb_dim, emb_dim),
        ba1=jnp.zeros((1, emb_dim), jnp.float32),
        wa2=dense(ks[8], emb_dim, emb_dim),
        ba2=jnp.zeros((1, emb_dim), jnp.float32),
        gamma=jnp.full((1, emb_dim), 1e-4, jnp.float32),  # nn.Parameter(ones(dim)*1e-4)
    )


def pack_params(p):
    """Pad feature dims to lane-dense sizes; all matmul weights become bf16.
    Zero padding (plus -1e9 bias on padded class logits) keeps the padded
    computation exactly equal to the unpadded one on the first EMB_DIM lanes."""
    def pad2(a, rows, cols, dtype=jnp.float32):
        z = jnp.zeros((rows, cols), jnp.float32).at[:a.shape[0], :a.shape[1]].set(a)
        return z.astype(dtype)

    b2 = jnp.full((1, NC_PAD), _NEG, jnp.float32).at[:, :N_CLASSES].set(p["b2"])
    return dict(
        conv_w=p["conv_w"],
        conv_b=p["conv_b"],
        w_feat=pad2(p["w_feat"], POOL_PAD, W2V_HIDDEN, jnp.bfloat16),
        w1=pad2(p["w1"], W2V_HIDDEN, FC_PAD, jnp.bfloat16),
        b1=pad2(p["b1"], 1, FC_PAD),
        w2=pad2(p["w2"], FC_PAD, NC_PAD, jnp.bfloat16),
        b2=b2,
        embeddings=pad2(p["embeddings"], NC_PAD, EMB_PAD, jnp.bfloat16),
        wa1=pad2(p["wa1"], EMB_PAD, EMB_PAD, jnp.bfloat16),
        ba1=pad2(p["ba1"], 1, EMB_PAD),
        wa2=pad2(p["wa2"], EMB_PAD, EMB_PAD, jnp.bfloat16),
        ba2=pad2(p["ba2"], 1, EMB_PAD),
        gamma=pad2(p["gamma"], 1, EMB_PAD),
    )


if __name__ == "__main__":
    key = jax.random.PRNGKey(0)
    kx, kp = jax.random.split(key)
    x = jax.random.normal(kx, (2, 2, 1024), jnp.float32)   # (batch, 2 channels, samples)
    params = pack_params(init_params(kp))
    out = cide_forward(x, params)
    out = jax.block_until_ready(out)
    assert out.shape == (2, 1, EMB_DIM), out.shape
    assert bool(jnp.all(jnp.isfinite(out)))
    print("KERNEL_OK")
</pallas_src>

<mosaic_0001>
module attributes {stable_mosaic.version = 11 : i64} {
  func.func @cide_kernel(%arg0: i32, %arg1: memref<8x384xf32, #tpu.memory_space<vmem>>, %arg2: memref<384x768xbf16, #tpu.memory_space<vmem>>, %arg3: memref<768x512xbf16, #tpu.memory_space<vmem>>, %arg4: memref<1x512xf32, #tpu.memory_space<vmem>>, %arg5: memref<512x128xbf16, #tpu.memory_space<vmem>>, %arg6: memref<1x128xf32, #tpu.memory_space<vmem>>, %arg7: memref<128x128xbf16, #tpu.memory_space<vmem>>, %arg8: memref<128x128xbf16, #tpu.memory_space<vmem>>, %arg9: memref<1x128xf32, #tpu.memory_space<vmem>>, %arg10: memref<128x128xbf16, #tpu.memory_space<vmem>>, %arg11: memref<1x128xf32, #tpu.memory_space<vmem>>, %arg12: memref<1x128xf32, #tpu.memory_space<vmem>>, %arg13: memref<8x128xf32, #tpu.memory_space<vmem>>) attributes {dimension_semantics = [#tpu.dimension_semantics<parallel>], iteration_bounds = array<i64: 1>, scalar_prefetch = 0 : i64, scratch_operands = 0 : i64, tpu.core_type = #tpu.core_type<tc>, window_params = [{transform_indices = @transform_0, window_bounds = array<i64: 8, 384>}, {pipeline_mode = #tpu.pipeline_mode<synchronous>, transform_indices = @transform_1, window_bounds = array<i64: 384, 768>}, {pipeline_mode = #tpu.pipeline_mode<synchronous>, transform_indices = @transform_2, window_bounds = array<i64: 768, 512>}, {pipeline_mode = #tpu.pipeline_mode<synchronous>, transform_indices = @transform_3, window_bounds = array<i64: 1, 512>}, {pipeline_mode = #tpu.pipeline_mode<synchronous>, transform_indices = @transform_4, window_bounds = array<i64: 512, 128>}, {pipeline_mode = #tpu.pipeline_mode<synchronous>, transform_indices = @transform_5, window_bounds = array<i64: 1, 128>}, {pipeline_mode = #tpu.pipeline_mode<synchronous>, transform_indices = @transform_6, window_bounds = array<i64: 128, 128>}, {pipeline_mode = #tpu.pipeline_mode<synchronous>, transform_indices = @transform_7, window_bounds = array<i64: 128, 128>}, {pipeline_mode = #tpu.pipeline_mode<synchronous>, transform_indices = @transform_8, window_bounds = array<i64: 1, 128>}, {pipeline_mode = #tpu.pipeline_mode<synchronous>, transform_indices = @transform_9, window_bounds = array<i64: 128, 128>}, {pipeline_mode = #tpu.pipeline_mode<synchronous>, transform_indices = @transform_10, window_bounds = array<i64: 1, 128>}, {pipeline_mode = #tpu.pipeline_mode<synchronous>, transform_indices = @transform_11, window_bounds = array<i64: 1, 128>}, {transform_indices = @transform_12, window_bounds = array<i64: 8, 128>}]} {
    %c0 = arith.constant 0 : index
    %c0_0 = arith.constant 0 : index
    %0 = vector.load %arg1[%c0, %c0_0] : memref<8x384xf32, #tpu.memory_space<vmem>>, vector<8x384xf32>
    %1 = arith.truncf %0 : vector<8x384xf32> to vector<8x384xbf16>
    %c0_1 = arith.constant 0 : index
    %c0_2 = arith.constant 0 : index
    %2 = vector.load %arg2[%c0_1, %c0_2] : memref<384x768xbf16, #tpu.memory_space<vmem>>, vector<384x768xbf16>
    %cst = arith.constant dense<0.000000e+00> : vector<8x768xf32>
    %3 = tpu.matmul %1, %2, %cst {dimension_numbers = #tpu.dot_dimension_numbers<[1], [0], [0], [1], [0, 0, 1, 1], [], []>} : vector<8x384xbf16>, vector<384x768xbf16>, vector<8x768xf32> -> vector<8x768xf32>
    %4 = arith.truncf %3 : vector<8x768xf32> to vector<8x768xbf16>
    %c0_3 = arith.constant 0 : index
    %c0_4 = arith.constant 0 : index
    %5 = vector.load %arg3[%c0_3, %c0_4] : memref<768x512xbf16, #tpu.memory_space<vmem>>, vector<768x512xbf16>
    %cst_5 = arith.constant dense<0.000000e+00> : vector<8x512xf32>
    %6 = tpu.matmul %4, %5, %cst_5 {dimension_numbers = #tpu.dot_dimension_numbers<[1], [0], [0], [1], [0, 0, 1, 1], [], []>} : vector<8x768xbf16>, vector<768x512xbf16>, vector<8x512xf32> -> vector<8x512xf32>
    %c0_6 = arith.constant 0 : index
    %c0_7 = arith.constant 0 : index
    %7 = vector.load %arg4[%c0_6, %c0_7] : memref<1x512xf32, #tpu.memory_space<vmem>>, vector<1x512xf32>
    %8 = vector.broadcast %7 : vector<1x512xf32> to vector<8x512xf32>
    %9 = arith.addf %6, %8 : vector<8x512xf32>
    %10 = arith.mulf %9, %9 : vector<8x512xf32>
    %11 = arith.mulf %9, %10 : vector<8x512xf32>
    %cst_8 = arith.constant 4.471500e-02 : f32
    %12 = vector.broadcast %cst_8 : f32 to vector<8x512xf32>
    %13 = arith.mulf %12, %11 : vector<8x512xf32>
    %14 = arith.addf %9, %13 : vector<8x512xf32>
    %cst_9 = arith.constant 0.797884583 : f32
    %15 = vector.broadcast %cst_9 : f32 to vector<8x512xf32>
    %16 = arith.mulf %15, %14 : vector<8x512xf32>
    %17 = math.tanh %16 : vector<8x512xf32>
    %cst_10 = arith.constant 1.000000e+00 : f32
    %18 = vector.broadcast %cst_10 : f32 to vector<8x512xf32>
    %19 = arith.addf %18, %17 : vector<8x512xf32>
    %cst_11 = arith.constant 5.000000e-01 : f32
    %20 = vector.broadcast %cst_11 : f32 to vector<8x512xf32>
    %21 = arith.mulf %20, %19 : vector<8x512xf32>
    %22 = arith.mulf %9, %21 : vector<8x512xf32>
    %23 = arith.truncf %22 : vector<8x512xf32> to vector<8x512xbf16>
    %c0_12 = arith.constant 0 : index
    %c0_13 = arith.constant 0 : index
    %24 = vector.load %arg5[%c0_12, %c0_13] : memref<512x128xbf16, #tpu.memory_space<vmem>>, vector<512x128xbf16>
    %cst_14 = arith.constant dense<0.000000e+00> : vector<8x128xf32>
    %25 = tpu.matmul %23, %24, %cst_14 {dimension_numbers = #tpu.dot_dimension_numbers<[1], [0], [0], [1], [0, 0, 1, 1], [], []>} : vector<8x512xbf16>, vector<512x128xbf16>, vector<8x128xf32> -> vector<8x128xf32>
    %c0_15 = arith.constant 0 : index
    %c0_16 = arith.constant 0 : index
    %26 = vector.load %arg6[%c0_15, %c0_16] : memref<1x128xf32, #tpu.memory_space<vmem>>, vector<1x128xf32>
    %27 = vector.broadcast %26 : vector<1x128xf32> to vector<8x128xf32>
    %28 = arith.addf %25, %27 : vector<8x128xf32>
    %cst_17 = arith.constant dense<0xFF800000> : vector<8xf32>
    %29 = vector.multi_reduction <maximumf>, %28, %cst_17 [1] : vector<8x128xf32> to vector<8xf32>
    %30 = vector.shape_cast %29 : vector<8xf32> to vector<8x1xf32>
    %31 = vector.broadcast %30 : vector<8x1xf32> to vector<8x128xf32>
    %32 = arith.subf %28, %31 : vector<8x128xf32>
    %33 = math.exp %32 : vector<8x128xf32>
    %cst_18 = arith.constant dense<0.000000e+00> : vector<8xf32>
    %34 = vector.multi_reduction <add>, %33, %cst_18 [1] : vector<8x128xf32> to vector<8xf32>
    %35 = vector.shape_cast %34 : vector<8xf32> to vector<8x1xf32>
    %36 = vector.broadcast %35 : vector<8x1xf32> to vector<8x128xf32>
    %37 = arith.divf %33, %36 : vector<8x128xf32>
    %38 = arith.truncf %37 : vector<8x128xf32> to vector<8x128xbf16>
    %c0_19 = arith.constant 0 : index
    %c0_20 = arith.constant 0 : index
    %39 = vector.load %arg7[%c0_19, %c0_20] : memref<128x128xbf16, #tpu.memory_space<vmem>>, vector<128x128xbf16>
    %cst_21 = arith.constant dense<0.000000e+00> : vector<8x128xf32>
    %40 = tpu.matmul %38, %39, %cst_21 {dimension_numbers = #tpu.dot_dimension_numbers<[1], [0], [0], [1], [0, 0, 1, 1], [], []>} : vector<8x128xbf16>, vector<128x128xbf16>, vector<8x128xf32> -> vector<8x128xf32>
    %41 = arith.truncf %40 : vector<8x128xf32> to vector<8x128xbf16>
    %c0_22 = arith.constant 0 : index
    %c0_23 = arith.constant 0 : index
    %42 = vector.load %arg8[%c0_22, %c0_23] : memref<128x128xbf16, #tpu.memory_space<vmem>>, vector<128x128xbf16>
    %cst_24 = arith.constant dense<0.000000e+00> : vector<8x128xf32>
    %43 = tpu.matmul %41, %42, %cst_24 {dimension_numbers = #tpu.dot_dimension_numbers<[1], [0], [0], [1], [0, 0, 1, 1], [], []>} : vector<8x128xbf16>, vector<128x128xbf16>, vector<8x128xf32> -> vector<8x128xf32>
    %c0_25 = arith.constant 0 : index
    %c0_26 = arith.constant 0 : index
    %44 = vector.load %arg9[%c0_25, %c0_26] : memref<1x128xf32, #tpu.memory_space<vmem>>, vector<1x128xf32>
    %45 = vector.broadcast %44 : vector<1x128xf32> to vector<8x128xf32>
    %46 = arith.addf %43, %45 : vector<8x128xf32>
    %47 = arith.mulf %46, %46 : vector<8x128xf32>
    %48 = arith.mulf %46, %47 : vector<8x128xf32>
    %cst_27 = arith.constant 4.471500e-02 : f32
    %49 = vector.broadcast %cst_27 : f32 to vector<8x128xf32>
    %50 = arith.mulf %49, %48 : vector<8x128xf32>
    %51 = arith.addf %46, %50 : vector<8x128xf32>
    %cst_28 = arith.constant 0.797884583 : f32
    %52 = vector.broadcast %cst_28 : f32 to vector<8x128xf32>
    %53 = arith.mulf %52, %51 : vector<8x128xf32>
    %54 = math.tanh %53 : vector<8x128xf32>
    %cst_29 = arith.constant 1.000000e+00 : f32
    %55 = vector.broadcast %cst_29 : f32 to vector<8x128xf32>
    %56 = arith.addf %55, %54 : vector<8x128xf32>
    %cst_30 = arith.constant 5.000000e-01 : f32
    %57 = vector.broadcast %cst_30 : f32 to vector<8x128xf32>
    %58 = arith.mulf %57, %56 : vector<8x128xf32>
    %59 = arith.mulf %46, %58 : vector<8x128xf32>
    %60 = arith.truncf %59 : vector<8x128xf32> to vector<8x128xbf16>
    %c0_31 = arith.constant 0 : index
    %c0_32 = arith.constant 0 : index
    %61 = vector.load %arg10[%c0_31, %c0_32] : memref<128x128xbf16, #tpu.memory_space<vmem>>, vector<128x128xbf16>
    %cst_33 = arith.constant dense<0.000000e+00> : vector<8x128xf32>
    %62 = tpu.matmul %60, %61, %cst_33 {dimension_numbers = #tpu.dot_dimension_numbers<[1], [0], [0], [1], [0, 0, 1, 1], [], []>} : vector<8x128xbf16>, vector<128x128xbf16>, vector<8x128xf32> -> vector<8x128xf32>
    %c0_34 = arith.constant 0 : index
    %c0_35 = arith.constant 0 : index
    %63 = vector.load %arg11[%c0_34, %c0_35] : memref<1x128xf32, #tpu.memory_space<vmem>>, vector<1x128xf32>
    %64 = vector.broadcast %63 : vector<1x128xf32> to vector<8x128xf32>
    %65 = arith.addf %62, %64 : vector<8x128xf32>
    %c0_36 = arith.constant 0 : index
    %c0_37 = arith.constant 0 : index
    %66 = vector.load %arg12[%c0_36, %c0_37] : memref<1x128xf32, #tpu.memory_space<vmem>>, vector<1x128xf32>
    %67 = vector.broadcast %66 : vector<1x128xf32> to vector<8x128xf32>
    %68 = arith.mulf %67, %65 : vector<8x128xf32>
    %69 = arith.addf %40, %68 : vector<8x128xf32>
    %c0_38 = arith.constant 0 : index
    %c0_39 = arith.constant 0 : index
    %70 = vector.load %arg13[%c0_38, %c0_39] : memref<8x128xf32, #tpu.memory_space<vmem>>, vector<8x128xf32>
    tpu.vector_store %arg13[%c0_38, %c0_39], %69 {strides = array<i32>} : memref<8x128xf32, #tpu.memory_space<vmem>>, vector<8x128xf32>,
    return
  }
  func.func @transform_0(%arg0: i32) -> (i32, i32) {
    %c0_i32 = arith.constant 0 : i32
    %c0_i32_0 = arith.constant 0 : i32
    return %arg0, %c0_i32 : i32, i32
  }
  func.func @transform_1(%arg0: i32) -> (i32, i32) {
    %c0_i32 = arith.constant 0 : i32
    %c0_i32_0 = arith.constant 0 : i32
    %c0_i32_1 = arith.constant 0 : i32
    return %c0_i32, %c0_i32_0 : i32, i32
  }
  func.func @transform_2(%arg0: i32) -> (i32, i32) {
    %c0_i32 = arith.constant 0 : i32
    %c0_i32_0 = arith.constant 0 : i32
    %c0_i32_1 = arith.constant 0 : i32
    return %c0_i32, %c0_i32_0 : i32, i32
  }
  func.func @transform_3(%arg0: i32) -> (i32, i32) {
    %c0_i32 = arith.constant 0 : i32
    %c0_i32_0 = arith.constant 0 : i32
    %c0_i32_1 = arith.constant 0 : i32
    return %c0_i32, %c0_i32_0 : i32, i32
  }
  func.func @transform_4(%arg0: i32) -> (i32, i32) {
    %c0_i32 = arith.constant 0 : i32
    %c0_i32_0 = arith.constant 0 : i32
    %c0_i32_1 = arith.constant 0 : i32
    return %c0_i32, %c0_i32_0 : i32, i32
  }
  func.func @transform_5(%arg0: i32) -> (i32, i32) {
    %c0_i32 = arith.constant 0 : i32
    %c0_i32_0 = arith.constant 0 : i32
    %c0_i32_1 = arith.constant 0 : i32
    return %c0_i32, %c0_i32_0 : i32, i32
  }
  func.func @transform_6(%arg0: i32) -> (i32, i32) {
    %c0_i32 = arith.constant 0 : i32
    %c0_i32_0 = arith.constant 0 : i32
    %c0_i32_1 = arith.constant 0 : i32
    return %c0_i32, %c0_i32_0 : i32, i32
  }
  func.func @transform_7(%arg0: i32) -> (i32, i32) {
    %c0_i32 = arith.constant 0 : i32
    %c0_i32_0 = arith.constant 0 : i32
    %c0_i32_1 = arith.constant 0 : i32
    return %c0_i32, %c0_i32_0 : i32, i32
  }
  func.func @transform_8(%arg0: i32) -> (i32, i32) {
    %c0_i32 = arith.constant 0 : i32
    %c0_i32_0 = arith.constant 0 : i32
    %c0_i32_1 = arith.constant 0 : i32
    return %c0_i32, %c0_i32_0 : i32, i32
  }
  func.func @transform_9(%arg0: i32) -> (i32, i32) {
    %c0_i32 = arith.constant 0 : i32
    %c0_i32_0 = arith.constant 0 : i32
    %c0_i32_1 = arith.constant 0 : i32
    return %c0_i32, %c0_i32_0 : i32, i32
  }
  func.func @transform_10(%arg0: i32) -> (i32, i32) {
    %c0_i32 = arith.constant 0 : i32
    %c0_i32_0 = arith.constant 0 : i32
    %c0_i32_1 = arith.constant 0 : i32
    return %c0_i32, %c0_i32_0 : i32, i32
  }
  func.func @transform_11(%arg0: i32) -> (i32, i32) {
    %c0_i32 = arith.constant 0 : i32
    %c0_i32_0 = arith.constant 0 : i32
    %c0_i32_1 = arith.constant 0 : i32
    return %c0_i32, %c0_i32_0 : i32, i32
  }
  func.func @transform_12(%arg0: i32) -> (i32, i32) {
    %c0_i32 = arith.constant 0 : i32
    %c0_i32_0 = arith.constant 0 : i32
    return %arg0, %c0_i32 : i32, i32
  }
}

</mosaic_0001>

<llo_original>
// kernel: tpu_custom_call.1
$region0: #{tpu_custom_call.1}
  #allocation0 [shape = 'u32[]', space=smem, size = 0x4, offset = 0x4, fixed_abs, tag = 'smem constant byte address 0x4 - core index']
  #allocation1 [shape = 'u32[144,128]{1,0:T(1,128)}', space=vmem, size = 0x12000, scoped, tag = 'internal scratch']
  %s0 = inlined_call_operand.hbm [shape: f32[8,384], index: 0, kind: input, shape index: {}]
  %s1 = inlined_call_operand.hbm [shape: bf16[384,768], index: 1, kind: input, shape index: {}]
  %s2 = inlined_call_operand.hbm [shape: bf16[768,512], index: 2, kind: input, shape index: {}]
  %s3 = inlined_call_operand.vmem [shape: f32[1,512], index: 3, kind: input, shape index: {}]
  %s4 = inlined_call_operand.hbm [shape: bf16[512,128], index: 4, kind: input, shape index: {}]
  %s5 = inlined_call_operand.vmem [shape: f32[1,128], index: 5, kind: input, shape index: {}]
  %s6 = inlined_call_operand.hbm [shape: bf16[128,128], index: 6, kind: input, shape index: {}]
  %s7 = inlined_call_operand.hbm [shape: bf16[128,128], index: 7, kind: input, shape index: {}]
  %s8 = inlined_call_operand.vmem [shape: f32[1,128], index: 8, kind: input, shape index: {}]
  %s9 = inlined_call_operand.hbm [shape: bf16[128,128], index: 9, kind: input, shape index: {}]
  %s10 = inlined_call_operand.vmem [shape: f32[1,128], index: 10, kind: input, shape index: {}]
  %s11 = inlined_call_operand.vmem [shape: f32[1,128], index: 11, kind: input, shape index: {}]
  %s12 = inlined_call_operand.hbm [shape: f32[8,128], index: 12, kind: output, shape index: {}]
  %s13 = sld [smem:[#allocation0]]
  $region86: #{tpu_custom_call.1} parent=0
    _
  %s15 = ssub.s32 1, %s13
  %s16 = scalar_select 0, %s15, %s13
  $region1: #{tpu_custom_call.1} parent=0
    #allocation2 [shape = 'u8[12288]{0}', space=vmem, size = 0x3000, scoped, tag = 'input window, operand 0, single buffered']
    #allocation3 [shape = 's32[1]{0}', space=sflag, size = 0x4, scoped, tag = 'scoped memory for tpu_custom_call.1']
    #allocation4 [shape = 's32[1]{0}', space=sflag, size = 0x4, scoped, tag = 'scoped memory for tpu_custom_call.1']
    #allocation5 [shape = 'u8[589824]{0}', space=vmem, size = 0x90000, scoped, tag = 'input window, operand 1, single buffered']
    #allocation6 [shape = 's32[1]{0}', space=sflag, size = 0x4, scoped, tag = 'scoped memory for tpu_custom_call.1']
    #allocation7 [shape = 'u8[786432]{0}', space=vmem, size = 0xc0000, scoped, tag = 'input window, operand 2, single buffered']
    #allocation8 [shape = 'u8[131072]{0}', space=vmem, size = 0x20000, scoped, tag = 'input window, operand 4, single buffered']
    #allocation9 [shape = 's32[1]{0}', space=sflag, size = 0x4, scoped, tag = 'scoped memory for tpu_custom_call.1']
    #allocation10 [shape = 'u8[32768]{0}', space=vmem, size = 0x8000, scoped, tag = 'input window, operand 6, single buffered']
    #allocation11 [shape = 'u8[32768]{0}', space=vmem, size = 0x8000, scoped, tag = 'input window, operand 7, single buffered']
    #allocation12 [shape = 's32[1]{0}', space=sflag, size = 0x4, scoped, tag = 'scoped memory for tpu_custom_call.1']
    #allocation13 [shape = 'u8[32768]{0}', space=vmem, size = 0x8000, scoped, tag = 'input window, operand 9, single buffered']
    #allocation14 [shape = 'u8[4096]{0}', space=vmem, size = 0x1000, scoped, tag = 'output window, operand 0, single buffered']
    %17 = vsyncpa [#allocation3], 0
    %18 = vsyncpa [#allocation6], 0
    %19 = vsyncpa [#allocation9], 0
    %20 = vsyncpa [#allocation12], 0
    %21 = vsyncpa [#allocation4], 0
    // Predicated region
    $region2: #{tpu_custom_call.1} parent=1 // pred_check
      _
    $region3: #{tpu_custom_call.1} parent=1 // pred_check_branch
      %23 = sbr.rel (0) target = $region5
    $region4: #{tpu_custom_call.1} parent=1 // pred_region
      %s25 = ssub.s32 384, 384
      %26 = vsyncadd [#allocation3], %s25
      %s28 = sshll.u32 [#allocation2], 4
      %s29 = int_to_ptr.vmem [resolvable:$true] %s28
      %31 = dma.hbm_to_vmem [thread:$0]  %s0, 384, %s29, [#allocation3]
    $region5: #{tpu_custom_call.1} parent=1 // pred_fallthru
      _
    // Predicated region
    $region6: #{tpu_custom_call.1} parent=1 // pred_check
      _
    $region7: #{tpu_custom_call.1} parent=1 // pred_check_branch
      %33 = sbr.rel (0) target = $region9
    $region8: #{tpu_custom_call.1} parent=1 // pred_region
      %s35 = ssub.s32 18432, 18432
      %36 = vsyncadd [#allocation6], %s35
      %s37 = sshll.u32 [#allocation5], 4
      %s38 = int_to_ptr.vmem [resolvable:$true] %s37
      %43 = dma.hbm_to_vmem [thread:$0]  %s1, 18432, %s38, [#allocation6], 384, 384, 24
    $region9: #{tpu_custom_call.1} parent=1 // pred_fallthru
      _
    // Predicated region
    $region10: #{tpu_custom_call.1} parent=1 // pred_check
      _
    $region11: #{tpu_custom_call.1} parent=1 // pred_check_branch
      %45 = sbr.rel (0) target = $region13
    $region12: #{tpu_custom_call.1} parent=1 // pred_region
      %s47 = ssub.s32 24576, 24576
      %48 = vsyncadd [#allocation6], %s47
      %s49 = sshll.u32 [#allocation7], 4
      %s50 = int_to_ptr.vmem [resolvable:$true] %s49
      %55 = dma.hbm_to_vmem [thread:$0]  %s2, 24576, %s50, [#allocation6], 256, 256, 16
    $region13: #{tpu_custom_call.1} parent=1 // pred_fallthru
      _
    // Predicated region
    $region14: #{tpu_custom_call.1} parent=1 // pred_check
      _
    $region15: #{tpu_custom_call.1} parent=1 // pred_check_branch
      %57 = sbr.rel (0) target = $region17
    $region16: #{tpu_custom_call.1} parent=1 // pred_region
      _
    $region17: #{tpu_custom_call.1} parent=1 // pred_fallthru
      _
    // Predicated region
    $region18: #{tpu_custom_call.1} parent=1 // pred_check
      _
    $region19: #{tpu_custom_call.1} parent=1 // pred_check_branch
      %59 = sbr.rel (0) target = $region21
    $region20: #{tpu_custom_call.1} parent=1 // pred_region
      %s61 = ssub.s32 4096, 4096
      %62 = vsyncadd [#allocation9], %s61
      %s63 = sshll.u32 [#allocation8], 4
      %s64 = int_to_ptr.vmem [resolvable:$true] %s63
      %69 = dma.hbm_to_vmem [thread:$0]  %s4, 4096, %s64, [#allocation9], 64, 64, 4
    $region21: #{tpu_custom_call.1} parent=1 // pred_fallthru
      _
    // Predicated region
    $region22: #{tpu_custom_call.1} parent=1 // pred_check
      _
    $region23: #{tpu_custom_call.1} parent=1 // pred_check_branch
      %71 = sbr.rel (0) target = $region25
    $region24: #{tpu_custom_call.1} parent=1 // pred_region
      _
    $region25: #{tpu_custom_call.1} parent=1 // pred_fallthru
      _
    // Predicated region
    $region26: #{tpu_custom_call.1} parent=1 // pred_check
      _
    $region27: #{tpu_custom_call.1} parent=1 // pred_check_branch
      %73 = sbr.rel (0) target = $region29
    $region28: #{tpu_custom_call.1} parent=1 // pred_region
      %s75 = ssub.s32 1024, 1024
      %76 = vsyncadd [#allocation9], %s75
      %s77 = sshll.u32 [#allocation10], 4
      %s78 = int_to_ptr.vmem [resolvable:$true] %s77
      %83 = dma.hbm_to_vmem [thread:$0]  %s6, 1024, %s78, [#allocation9], 64, 64, 4
    $region29: #{tpu_custom_call.1} parent=1 // pred_fallthru
      _
    // Predicated region
    $region30: #{tpu_custom_call.1} parent=1 // pred_check
      _
    $region31: #{tpu_custom_call.1} parent=1 // pred_check_branch
      %85 = sbr.rel (0) target = $region33
    $region32: #{tpu_custom_call.1} parent=1 // pred_region
      %s87 = ssub.s32 1024, 1024
      %88 = vsyncadd [#allocation12], %s87
      %s89 = sshll.u32 [#allocation11], 4
      %s90 = int_to_ptr.vmem [resolvable:$true] %s89
      %95 = dma.hbm_to_vmem [thread:$0]  %s7, 1024, %s90, [#allocation12], 64, 64, 4
    $region33: #{tpu_custom_call.1} parent=1 // pred_fallthru
      _
    // Predicated region
    $region34: #{tpu_custom_call.1} parent=1 // pred_check
      _
    $region35: #{tpu_custom_call.1} parent=1 // pred_check_branch
      %97 = sbr.rel (0) target = $region37
    $region36: #{tpu_custom_call.1} parent=1 // pred_region
      _
    $region37: #{tpu_custom_call.1} parent=1 // pred_fallthru
      _
    // Predicated region
    $region38: #{tpu_custom_call.1} parent=1 // pred_check
      _
    $region39: #{tpu_custom_call.1} parent=1 // pred_check_branch
      %99 = sbr.rel (0) target = $region41
    $region40: #{tpu_custom_call.1} parent=1 // pred_region
      %s101 = ssub.s32 1024, 1024
      %102 = vsyncadd [#allocation12], %s101
      %s103 = sshll.u32 [#allocation13], 4
      %s104 = int_to_ptr.vmem [resolvable:$true] %s103
      %109 = dma.hbm_to_vmem [thread:$0]  %s9, 1024, %s104, [#allocation12], 64, 64, 4
    $region41: #{tpu_custom_call.1} parent=1 // pred_fallthru
      _
    // Predicated region
    $region42: #{tpu_custom_call.1} parent=1 // pred_check
      _
    $region43: #{tpu_custom_call.1} parent=1 // pred_check_branch
      %111 = sbr.rel (0) target = $region45
    $region44: #{tpu_custom_call.1} parent=1 // pred_region
      _
    $region45: #{tpu_custom_call.1} parent=1 // pred_fallthru
      _
    // Predicated region
    $region46: #{tpu_custom_call.1} parent=1 // pred_check
      _
    $region47: #{tpu_custom_call.1} parent=1 // pred_check_branch
      %113 = sbr.rel (0) target = $region49
    $region48: #{tpu_custom_call.1} parent=1 // pred_region
      _
    $region49: #{tpu_custom_call.1} parent=1 // pred_fallthru
      _
    // Predicated region
    $region50: #{tpu_custom_call.1} parent=1 // pred_check
      _
    $region51: #{tpu_custom_call.1} parent=1 // pred_check_branch
      %115 = sbr.rel (0) target = $region53
    $region52: #{tpu_custom_call.1} parent=1 // pred_region
      %116 = dma.done [#allocation3], 384
    $region53: #{tpu_custom_call.1} parent=1 // pred_fallthru
      _
    // Predicated region
    $region54: #{tpu_custom_call.1} parent=1 // pred_check
      _
    $region55: #{tpu_custom_call.1} parent=1 // pred_check_branch
      %118 = sbr.rel (0) target = $region57
    $region56: #{tpu_custom_call.1} parent=1 // pred_region
      %119 = dma.done [#allocation6], 18432
    $region57: #{tpu_custom_call.1} parent=1 // pred_fallthru
      _
    // Predicated region
    $region58: #{tpu_custom_call.1} parent=1 // pred_check
      _
    $region59: #{tpu_custom_call.1} parent=1 // pred_check_branch
      %121 = sbr.rel (0) target = $region61
    $region60: #{tpu_custom_call.1} parent=1 // pred_region
      %122 = dma.done [#allocation6], 24576
    $region61: #{tpu_custom_call.1} parent=1 // pred_fallthru
      _
    // Predicated region
    $region62: #{tpu_custom_call.1} parent=1 // pred_check
      _
    $region63: #{tpu_custom_call.1} parent=1 // pred_check_branch
      %124 = sbr.rel (0) target = $region65
    $region64: #{tpu_custom_call.1} parent=1 // pred_region
      %125 = dma.done [#allocation9], 4096
    $region65: #{tpu_custom_call.1} parent=1 // pred_fallthru
      _
    // Predicated region
    $region66: #{tpu_custom_call.1} parent=1 // pred_check
      _
    $region67: #{tpu_custom_call.1} parent=1 // pred_check_branch
      %127 = sbr.rel (0) target = $region69
    $region68: #{tpu_custom_call.1} parent=1 // pred_region
      %128 = dma.done [#allocation9], 1024
    $region69: #{tpu_custom_call.1} parent=1 // pred_fallthru
      _
    // Predicated region
    $region70: #{tpu_custom_call.1} parent=1 // pred_check
      _
    $region71: #{tpu_custom_call.1} parent=1 // pred_check_branch
      %130 = sbr.rel (0) target = $region73
    $region72: #{tpu_custom_call.1} parent=1 // pred_region
      %131 = dma.done [#allocation12], 1024
    $region73: #{tpu_custom_call.1} parent=1 // pred_fallthru
      _
    // Predicated region
    $region74: #{tpu_custom_call.1} parent=1 // pred_check
      _
    $region75: #{tpu_custom_call.1} parent=1 // pred_check_branch
      %133 = sbr.rel (0) target = $region77
    $region76: #{tpu_custom_call.1} parent=1 // pred_region
      %134 = dma.done [#allocation12], 1024
    $region77: #{tpu_custom_call.1} parent=1 // pred_fallthru
      _
    %v136 = vld [vmem:[#allocation2] sm:$0xff]
    %v137 = vld [vmem:[#allocation2 + $0x8] sm:$0xff]
    %v138 = vld [vmem:[#allocation2 + $0x10] sm:$0xff]
    %v139 = vpack.c.bf16 %v136, %v136
    %v140 = vpack.c.bf16 %v137, %v137
    %v141 = vpack.c.bf16 %v138, %v138
    %v142 = vld [vmem:[#allocation5] sm:$0xff]
    %v143 = vld [vmem:[#allocation5 + $0x8] sm:$0xff]
    %v144 = vld [vmem:[#allocation5 + $0x10] sm:$0xff]
    %v145 = vld [vmem:[#allocation5 + $0x18] sm:$0xff]
    %v146 = vld [vmem:[#allocation5 + $0x20] sm:$0xff]
    %v147 = vld [vmem:[#allocation5 + $0x28] sm:$0xff]
    %v148 = vld [vmem:[#allocation5 + $0x30] sm:$0xff]
    %v149 = vld [vmem:[#allocation5 + $0x38] sm:$0xff]
    %v150 = vld [vmem:[#allocation5 + $0x40] sm:$0xff]
    %v151 = vld [vmem:[#allocation5 + $0x48] sm:$0xff]
    %v152 = vld [vmem:[#allocation5 + $0x50] sm:$0xff]
    %v153 = vld [vmem:[#allocation5 + $0x58] sm:$0xff]
    %v154 = vld [vmem:[#allocation5 + $0x60] sm:$0xff]
    %v155 = vld [vmem:[#allocation5 + $0x68] sm:$0xff]
    %v156 = vld [vmem:[#allocation5 + $0x70] sm:$0xff]
    %v157 = vld [vmem:[#allocation5 + $0x78] sm:$0xff]
    %v158 = vld [vmem:[#allocation5 + $0x80] sm:$0xff]
    %v159 = vld [vmem:[#allocation5 + $0x88] sm:$0xff]
    %v160 = vld [vmem:[#allocation5 + $0x90] sm:$0xff]
    %v161 = vld [vmem:[#allocation5 + $0x98] sm:$0xff]
    %v162 = vld [vmem:[#allocation5 + $0xa0] sm:$0xff]
    %v163 = vld [vmem:[#allocation5 + $0xa8] sm:$0xff]
    %v164 = vld [vmem:[#allocation5 + $0xb0] sm:$0xff]
    %v165 = vld [vmem:[#allocation5 + $0xb8] sm:$0xff]
    %v166 = vld [vmem:[#allocation5 + $0xc0] sm:$0xff]
    %v167 = vld [vmem:[#allocation5 + $0xc8] sm:$0xff]
    %v168 = vld [vmem:[#allocation5 + $0xd0] sm:$0xff]
    %v169 = vld [vmem:[#allocation5 + $0xd8] sm:$0xff]
    %v170 = vld [vmem:[#allocation5 + $0xe0] sm:$0xff]
    %v171 = vld [vmem:[#allocation5 + $0xe8] sm:$0xff]
    %v172 = vld [vmem:[#allocation5 + $0xf0] sm:$0xff]
    %v173 = vld [vmem:[#allocation5 + $0xf8] sm:$0xff]
    %v174 = vld [vmem:[#allocation5 + $0x100] sm:$0xff]
    %v175 = vld [vmem:[#allocation5 + $0x108] sm:$0xff]
    %v176 = vld [vmem:[#allocation5 + $0x110] sm:$0xff]
    %v177 = vld [vmem:[#allocation5 + $0x118] sm:$0xff]
    %v178 = vld [vmem:[#allocation5 + $0x120] sm:$0xff]
    %v179 = vld [vmem:[#allocation5 + $0x128] sm:$0xff]
    %v180 = vld [vmem:[#allocation5 + $0x130] sm:$0xff]
    %v181 = vld [vmem:[#allocation5 + $0x138] sm:$0xff]
    %v182 = vld [vmem:[#allocation5 + $0x140] sm:$0xff]
    %v183 = vld [vmem:[#allocation5 + $0x148] sm:$0xff]
    %v184 = vld [vmem:[#allocation5 + $0x150] sm:$0xff]
    %v185 = vld [vmem:[#allocation5 + $0x158] sm:$0xff]
    %v186 = vld [vmem:[#allocation5 + $0x160] sm:$0xff]
    %v187 = vld [vmem:[#allocation5 + $0x168] sm:$0xff]
    %v188 = vld [vmem:[#allocation5 + $0x170] sm:$0xff]
    %v189 = vld [vmem:[#allocation5 + $0x178] sm:$0xff]
    %v190 = vld [vmem:[#allocation5 + $0x180] sm:$0xff]
    %v191 = vld [vmem:[#allocation5 + $0x188] sm:$0xff]
    %v192 = vld [vmem:[#allocation5 + $0x190] sm:$0xff]
    %v193 = vld [vmem:[#allocation5 + $0x198] sm:$0xff]
    %v194 = vld [vmem:[#allocation5 + $0x1a0] sm:$0xff]
    %v195 = vld [vmem:[#allocation5 + $0x1a8] sm:$0xff]
    %v196 = vld [vmem:[#allocation5 + $0x1b0] sm:$0xff]
    %v197 = vld [vmem:[#allocation5 + $0x1b8] sm:$0xff]
    %v198 = vld [vmem:[#allocation5 + $0x1c0] sm:$0xff]
    %v199 = vld [vmem:[#allocation5 + $0x1c8] sm:$0xff]
    %v200 = vld [vmem:[#allocation5 + $0x1d0] sm:$0xff]
    %v201 = vld [vmem:[#allocation5 + $0x1d8] sm:$0xff]
    %v202 = vld [vmem:[#allocation5 + $0x1e0] sm:$0xff]
    %v203 = vld [vmem:[#allocation5 + $0x1e8] sm:$0xff]
    %v204 = vld [vmem:[#allocation5 + $0x1f0] sm:$0xff]
    %v205 = vld [vmem:[#allocation5 + $0x1f8] sm:$0xff]
    %v206 = vld [vmem:[#allocation5 + $0x200] sm:$0xff]
    %v207 = vld [vmem:[#allocation5 + $0x208] sm:$0xff]
    %v208 = vld [vmem:[#allocation5 + $0x210] sm:$0xff]
    %v209 = vld [vmem:[#allocation5 + $0x218] sm:$0xff]
    %v210 = vld [vmem:[#allocation5 + $0x220] sm:$0xff]
    %v211 = vld [vmem:[#allocation5 + $0x228] sm:$0xff]
    %v212 = vld [vmem:[#allocation5 + $0x230] sm:$0xff]
    %v213 = vld [vmem:[#allocation5 + $0x238] sm:$0xff]
    %v214 = vld [vmem:[#allocation5 + $0x240] sm:$0xff]
    %v215 = vld [vmem:[#allocation5 + $0x248] sm:$0xff]
    %v216 = vld [vmem:[#allocation5 + $0x250] sm:$0xff]
    %v217 = vld [vmem:[#allocation5 + $0x258] sm:$0xff]
    %v218 = vld [vmem:[#allocation5 + $0x260] sm:$0xff]
    %v219 = vld [vmem:[#allocation5 + $0x268] sm:$0xff]
    %v220 = vld [vmem:[#allocation5 + $0x270] sm:$0xff]
    %v221 = vld [vmem:[#allocation5 + $0x278] sm:$0xff]
    %v222 = vld [vmem:[#allocation5 + $0x280] sm:$0xff]
    %v223 = vld [vmem:[#allocation5 + $0x288] sm:$0xff]
    %v224 = vld [vmem:[#allocation5 + $0x290] sm:$0xff]
    %v225 = vld [vmem:[#allocation5 + $0x298] sm:$0xff]
    %v226 = vld [vmem:[#allocation5 + $0x2a0] sm:$0xff]
    %v227 = vld [vmem:[#allocation5 + $0x2a8] sm:$0xff]
    %v228 = vld [vmem:[#allocation5 + $0x2b0] sm:$0xff]
    %v229 = vld [vmem:[#allocation5 + $0x2b8] sm:$0xff]
    %v230 = vld [vmem:[#allocation5 + $0x2c0] sm:$0xff]
    %v231 = vld [vmem:[#allocation5 + $0x2c8] sm:$0xff]
    %v232 = vld [vmem:[#allocation5 + $0x2d0] sm:$0xff]
    %v233 = vld [vmem:[#allocation5 + $0x2d8] sm:$0xff]
    %v234 = vld [vmem:[#allocation5 + $0x2e0] sm:$0xff]
    %v235 = vld [vmem:[#allocation5 + $0x2e8] sm:$0xff]
    %v236 = vld [vmem:[#allocation5 + $0x2f0] sm:$0xff]
    %v237 = vld [vmem:[#allocation5 + $0x2f8] sm:$0xff]
    %v238 = vld [vmem:[#allocation5 + $0x300] sm:$0xff]
    %v239 = vld [vmem:[#allocation5 + $0x308] sm:$0xff]
    %v240 = vld [vmem:[#allocation5 + $0x310] sm:$0xff]
    %v241 = vld [vmem:[#allocation5 + $0x318] sm:$0xff]
    %v242 = vld [vmem:[#allocation5 + $0x320] sm:$0xff]
    %v243 = vld [vmem:[#allocation5 + $0x328] sm:$0xff]
    %v244 = vld [vmem:[#allocation5 + $0x330] sm:$0xff]
    %v245 = vld [vmem:[#allocation5 + $0x338] sm:$0xff]
    %v246 = vld [vmem:[#allocation5 + $0x340] sm:$0xff]
    %v247 = vld [vmem:[#allocation5 + $0x348] sm:$0xff]
    %v248 = vld [vmem:[#allocation5 + $0x350] sm:$0xff]
    %v249 = vld [vmem:[#allocation5 + $0x358] sm:$0xff]
    %v250 = vld [vmem:[#allocation5 + $0x360] sm:$0xff]
    %v251 = vld [vmem:[#allocation5 + $0x368] sm:$0xff]
    %v252 = vld [vmem:[#allocation5 + $0x370] sm:$0xff]
    %v253 = vld [vmem:[#allocation5 + $0x378] sm:$0xff]
    %v254 = vld [vmem:[#allocation5 + $0x380] sm:$0xff]
    %v255 = vld [vmem:[#allocation5 + $0x388] sm:$0xff]
    %v256 = vld [vmem:[#allocation5 + $0x390] sm:$0xff]
    %v257 = vld [vmem:[#allocation5 + $0x398] sm:$0xff]
    %v258 = vld [vmem:[#allocation5 + $0x3a0] sm:$0xff]
    %v259 = vld [vmem:[#allocation5 + $0x3a8] sm:$0xff]
    %v260 = vld [vmem:[#allocation5 + $0x3b0] sm:$0xff]
    %v261 = vld [vmem:[#allocation5 + $0x3b8] sm:$0xff]
    %v262 = vld [vmem:[#allocation5 + $0x3c0] sm:$0xff]
    %v263 = vld [vmem:[#allocation5 + $0x3c8] sm:$0xff]
    %v264 = vld [vmem:[#allocation5 + $0x3d0] sm:$0xff]
    %v265 = vld [vmem:[#allocation5 + $0x3d8] sm:$0xff]
    %v266 = vld [vmem:[#allocation5 + $0x3e0] sm:$0xff]
    %v267 = vld [vmem:[#allocation5 + $0x3e8] sm:$0xff]
    %v268 = vld [vmem:[#allocation5 + $0x3f0] sm:$0xff]
    %v269 = vld [vmem:[#allocation5 + $0x3f8] sm:$0xff]
    %v270 = vld [vmem:[#allocation5 + $0x400] sm:$0xff]
    %v271 = vld [vmem:[#allocation5 + $0x408] sm:$0xff]
    %v272 = vld [vmem:[#allocation5 + $0x410] sm:$0xff]
    %v273 = vld [vmem:[#allocation5 + $0x418] sm:$0xff]
    %v274 = vld [vmem:[#allocation5 + $0x420] sm:$0xff]
    %v275 = vld [vmem:[#allocation5 + $0x428] sm:$0xff]
    %v276 = vld [vmem:[#allocation5 + $0x430] sm:$0xff]
    %v277 = vld [vmem:[#allocation5 + $0x438] sm:$0xff]
    %v278 = vld [vmem:[#allocation5 + $0x440] sm:$0xff]
    %v279 = vld [vmem:[#allocation5 + $0x448] sm:$0xff]
    %v280 = vld [vmem:[#allocation5 + $0x450] sm:$0xff]
    %v281 = vld [vmem:[#allocation5 + $0x458] sm:$0xff]
    %v282 = vld [vmem:[#allocation5 + $0x460] sm:$0xff]
    %v283 = vld [vmem:[#allocation5 + $0x468] sm:$0xff]
    %v284 = vld [vmem:[#allocation5 + $0x470] sm:$0xff]
    %v285 = vld [vmem:[#allocation5 + $0x478] sm:$0xff]
    %v430 = vunpack.c.l.b16 %v142
    %v431 = vunpack.c.h.b16 %v142
    %v432 = vunpack.c.l.b16 %v143
    %v433 = vunpack.c.h.b16 %v143
    %v434 = vunpack.c.l.b16 %v144
    %v435 = vunpack.c.h.b16 %v144
    %v436 = vunpack.c.l.b16 %v145
    %v437 = vunpack.c.h.b16 %v145
    %v438 = vunpack.c.l.b16 %v146
    %v439 = vunpack.c.h.b16 %v146
    %v440 = vunpack.c.l.b16 %v147
    %v441 = vunpack.c.h.b16 %v147
    %v442 = vunpack.c.l.b16 %v148
    %v443 = vunpack.c.h.b16 %v148
    %v444 = vunpack.c.l.b16 %v149
    %v445 = vunpack.c.h.b16 %v149
    %v446 = vunpack.c.l.b16 %v150
    %v447 = vunpack.c.h.b16 %v150
    %v448 = vunpack.c.l.b16 %v151
    %v449 = vunpack.c.h.b16 %v151
    %v450 = vunpack.c.l.b16 %v152
    %v451 = vunpack.c.h.b16 %v152
    %v452 = vunpack.c.l.b16 %v153
    %v453 = vunpack.c.h.b16 %v153
    %v454 = vunpack.c.l.b16 %v154
    %v455 = vunpack.c.h.b16 %v154
    %v456 = vunpack.c.l.b16 %v155
    %v457 = vunpack.c.h.b16 %v155
    %v458 = vunpack.c.l.b16 %v156
    %v459 = vunpack.c.h.b16 %v156
    %v460 = vunpack.c.l.b16 %v157
    %v461 = vunpack.c.h.b16 %v157
    %v462 = vunpack.c.l.b16 %v158
    %v463 = vunpack.c.h.b16 %v158
    %v464 = vunpack.c.l.b16 %v159
    %v465 = vunpack.c.h.b16 %v159
    %v466 = vunpack.c.l.b16 %v160
    %v467 = vunpack.c.h.b16 %v160
    %v468 = vunpack.c.l.b16 %v161
    %v469 = vunpack.c.h.b16 %v161
    %v470 = vunpack.c.l.b16 %v162
    %v471 = vunpack.c.h.b16 %v162
    %v472 = vunpack.c.l.b16 %v163
    %v473 = vunpack.c.h.b16 %v163
    %v474 = vunpack.c.l.b16 %v164
    %v475 = vunpack.c.h.b16 %v164
    %v476 = vunpack.c.l.b16 %v165
    %v477 = vunpack.c.h.b16 %v165
    %v478 = vunpack.c.l.b16 %v166
    %v479 = vunpack.c.h.b16 %v166
    %v480 = vunpack.c.l.b16 %v167
    %v481 = vunpack.c.h.b16 %v167
    %v482 = vunpack.c.l.b16 %v168
    %v483 = vunpack.c.h.b16 %v168
    %v484 = vunpack.c.l.b16 %v169
    %v485 = vunpack.c.h.b16 %v169
    %v486 = vunpack.c.l.b16 %v170
    %v487 = vunpack.c.h.b16 %v170
    %v488 = vunpack.c.l.b16 %v171
    %v489 = vunpack.c.h.b16 %v171
    %v490 = vunpack.c.l.b16 %v172
    %v491 = vunpack.c.h.b16 %v172
    %v492 = vunpack.c.l.b16 %v173
    %v493 = vunpack.c.h.b16 %v173
    %v494 = vunpack.c.l.b16 %v174
    %v495 = vunpack.c.h.b16 %v174
    %v496 = vunpack.c.l.b16 %v175
    %v497 = vunpack.c.h.b16 %v175
    %v498 = vunpack.c.l.b16 %v176
    %v499 = vunpack.c.h.b16 %v176
    %v500 = vunpack.c.l.b16 %v177
    %v501 = vunpack.c.h.b16 %v177
    %v502 = vunpack.c.l.b16 %v178
    %v503 = vunpack.c.h.b16 %v178
    %v504 = vunpack.c.l.b16 %v179
    %v505 = vunpack.c.h.b16 %v179
    %v506 = vunpack.c.l.b16 %v180
    %v507 = vunpack.c.h.b16 %v180
    %v508 = vunpack.c.l.b16 %v181
    %v509 = vunpack.c.h.b16 %v181
    %v510 = vunpack.c.l.b16 %v182
    %v511 = vunpack.c.h.b16 %v182
    %v512 = vunpack.c.l.b16 %v183
    %v513 = vunpack.c.h.b16 %v183
    %v514 = vunpack.c.l.b16 %v184
    %v515 = vunpack.c.h.b16 %v184
    %v516 = vunpack.c.l.b16 %v185
    %v517 = vunpack.c.h.b16 %v185
    %v518 = vunpack.c.l.b16 %v186
    %v519 = vunpack.c.h.b16 %v186
    %v520 = vunpack.c.l.b16 %v187
    %v521 = vunpack.c.h.b16 %v187
    %v522 = vunpack.c.l.b16 %v188
    %v523 = vunpack.c.h.b16 %v188
    %v524 = vunpack.c.l.b16 %v189
    %v525 = vunpack.c.h.b16 %v189
    %v526 = vunpack.c.l.b16 %v190
    %v527 = vunpack.c.h.b16 %v190
    %v528 = vunpack.c.l.b16 %v191
    %v529 = vunpack.c.h.b16 %v191
    %v530 = vunpack.c.l.b16 %v192
    %v531 = vunpack.c.h.b16 %v192
    %v532 = vunpack.c.l.b16 %v193
    %v533 = vunpack.c.h.b16 %v193
    %v534 = vunpack.c.l.b16 %v194
    %v535 = vunpack.c.h.b16 %v194
    %v536 = vunpack.c.l.b16 %v195
    %v537 = vunpack.c.h.b16 %v195
    %v538 = vunpack.c.l.b16 %v196
    %v539 = vunpack.c.h.b16 %v196
    %v540 = vunpack.c.l.b16 %v197
    %v541 = vunpack.c.h.b16 %v197
    %v542 = vunpack.c.l.b16 %v198
    %v543 = vunpack.c.h.b16 %v198
    %v544 = vunpack.c.l.b16 %v199
    %v545 = vunpack.c.h.b16 %v199
    %v546 = vunpack.c.l.b16 %v200
    %v547 = vunpack.c.h.b16 %v200
    %v548 = vunpack.c.l.b16 %v201
    %v549 = vunpack.c.h.b16 %v201
    %v550 = vunpack.c.l.b16 %v202
    %v551 = vunpack.c.h.b16 %v202
    %v552 = vunpack.c.l.b16 %v203
    %v553 = vunpack.c.h.b16 %v203
    %v554 = vunpack.c.l.b16 %v204
    %v555 = vunpack.c.h.b16 %v204
    %v556 = vunpack.c.l.b16 %v205
    %v557 = vunpack.c.h.b16 %v205
    %v558 = vunpack.c.l.b16 %v206
    %v559 = vunpack.c.h.b16 %v206
    %v560 = vunpack.c.l.b16 %v207
    %v561 = vunpack.c.h.b16 %v207
    %v562 = vunpack.c.l.b16 %v208
    %v563 = vunpack.c.h.b16 %v208
    %v564 = vunpack.c.l.b16 %v209
    %v565 = vunpack.c.h.b16 %v209
    %v566 = vunpack.c.l.b16 %v210
    %v567 = vunpack.c.h.b16 %v210
    %v568 = vunpack.c.l.b16 %v211
    %v569 = vunpack.c.h.b16 %v211
    %v570 = vunpack.c.l.b16 %v212
    %v571 = vunpack.c.h.b16 %v212
    %v572 = vunpack.c.l.b16 %v213
    %v573 = vunpack.c.h.b16 %v213
    %v574 = vunpack.c.l.b16 %v214
    %v575 = vunpack.c.h.b16 %v214
    %v576 = vunpack.c.l.b16 %v215
    %v577 = vunpack.c.h.b16 %v215
    %v578 = vunpack.c.l.b16 %v216
    %v579 = vunpack.c.h.b16 %v216
    %v580 = vunpack.c.l.b16 %v217
    %v581 = vunpack.c.h.b16 %v217
    %v582 = vunpack.c.l.b16 %v218
    %v583 = vunpack.c.h.b16 %v218
    %v584 = vunpack.c.l.b16 %v219
    %v585 = vunpack.c.h.b16 %v219
    %v586 = vunpack.c.l.b16 %v220
    %v587 = vunpack.c.h.b16 %v220
    %v588 = vunpack.c.l.b16 %v221
    %v589 = vunpack.c.h.b16 %v221
    %v590 = vunpack.c.l.b16 %v222
    %v591 = vunpack.c.h.b16 %v222
    %v592 = vunpack.c.l.b16 %v223
    %v593 = vunpack.c.h.b16 %v223
    %v594 = vunpack.c.l.b16 %v224
    %v595 = vunpack.c.h.b16 %v224
    %v596 = vunpack.c.l.b16 %v225
    %v597 = vunpack.c.h.b16 %v225
    %v598 = vunpack.c.l.b16 %v226
    %v599 = vunpack.c.h.b16 %v226
    %v600 = vunpack.c.l.b16 %v227
    %v601 = vunpack.c.h.b16 %v227
    %v602 = vunpack.c.l.b16 %v228
    %v603 = vunpack.c.h.b16 %v228
    %v604 = vunpack.c.l.b16 %v229
    %v605 = vunpack.c.h.b16 %v229
    %v606 = vunpack.c.l.b16 %v230
    %v607 = vunpack.c.h.b16 %v230
    %v608 = vunpack.c.l.b16 %v231
    %v609 = vunpack.c.h.b16 %v231
    %v610 = vunpack.c.l.b16 %v232
    %v611 = vunpack.c.h.b16 %v232
    %v612 = vunpack.c.l.b16 %v233
    %v613 = vunpack.c.h.b16 %v233
    %v614 = vunpack.c.l.b16 %v234
    %v615 = vunpack.c.h.b16 %v234
    %v616 = vunpack.c.l.b16 %v235
    %v617 = vunpack.c.h.b16 %v235
    %v618 = vunpack.c.l.b16 %v236
    %v619 = vunpack.c.h.b16 %v236
    %v620 = vunpack.c.l.b16 %v237
    %v621 = vunpack.c.h.b16 %v237
    %v622 = vunpack.c.l.b16 %v238
    %v623 = vunpack.c.h.b16 %v238
    %v624 = vunpack.c.l.b16 %v239
    %v625 = vunpack.c.h.b16 %v239
    %v626 = vunpack.c.l.b16 %v240
    %v627 = vunpack.c.h.b16 %v240
    %v628 = vunpack.c.l.b16 %v241
    %v629 = vunpack.c.h.b16 %v241
    %v630 = vunpack.c.l.b16 %v242
    %v631 = vunpack.c.h.b16 %v242
    %v632 = vunpack.c.l.b16 %v243
    %v633 = vunpack.c.h.b16 %v243
    %v634 = vunpack.c.l.b16 %v244
    %v635 = vunpack.c.h.b16 %v244
    %v636 = vunpack.c.l.b16 %v245
    %v637 = vunpack.c.h.b16 %v245
    %v638 = vunpack.c.l.b16 %v246
    %v639 = vunpack.c.h.b16 %v246
    %v640 = vunpack.c.l.b16 %v247
    %v641 = vunpack.c.h.b16 %v247
    %v642 = vunpack.c.l.b16 %v248
    %v643 = vunpack.c.h.b16 %v248
    %v644 = vunpack.c.l.b16 %v249
    %v645 = vunpack.c.h.b16 %v249
    %v646 = vunpack.c.l.b16 %v250
    %v647 = vunpack.c.h.b16 %v250
    %v648 = vunpack.c.l.b16 %v251
    %v649 = vunpack.c.h.b16 %v251
    %v650 = vunpack.c.l.b16 %v252
    %v651 = vunpack.c.h.b16 %v252
    %v652 = vunpack.c.l.b16 %v253
    %v653 = vunpack.c.h.b16 %v253
    %v654 = vunpack.c.l.b16 %v254
    %v655 = vunpack.c.h.b16 %v254
    %v656 = vunpack.c.l.b16 %v255
    %v657 = vunpack.c.h.b16 %v255
    %v658 = vunpack.c.l.b16 %v256
    %v659 = vunpack.c.h.b16 %v256
    %v660 = vunpack.c.l.b16 %v257
    %v661 = vunpack.c.h.b16 %v257
    %v662 = vunpack.c.l.b16 %v258
    %v663 = vunpack.c.h.b16 %v258
    %v664 = vunpack.c.l.b16 %v259
    %v665 = vunpack.c.h.b16 %v259
    %v666 = vunpack.c.l.b16 %v260
    %v667 = vunpack.c.h.b16 %v260
    %v668 = vunpack.c.l.b16 %v261
    %v669 = vunpack.c.h.b16 %v261
    %v670 = vunpack.c.l.b16 %v262
    %v671 = vunpack.c.h.b16 %v262
    %v672 = vunpack.c.l.b16 %v263
    %v673 = vunpack.c.h.b16 %v263
    %v674 = vunpack.c.l.b16 %v264
    %v675 = vunpack.c.h.b16 %v264
    %v676 = vunpack.c.l.b16 %v265
    %v677 = vunpack.c.h.b16 %v265
    %v678 = vunpack.c.l.b16 %v266
    %v679 = vunpack.c.h.b16 %v266
    %v680 = vunpack.c.l.b16 %v267
    %v681 = vunpack.c.h.b16 %v267
    %v682 = vunpack.c.l.b16 %v268
    %v683 = vunpack.c.h.b16 %v268
    %v684 = vunpack.c.l.b16 %v269
    %v685 = vunpack.c.h.b16 %v269
    %v686 = vunpack.c.l.b16 %v270
    %v687 = vunpack.c.h.b16 %v270
    %v688 = vunpack.c.l.b16 %v271
    %v689 = vunpack.c.h.b16 %v271
    %v690 = vunpack.c.l.b16 %v272
    %v691 = vunpack.c.h.b16 %v272
    %v692 = vunpack.c.l.b16 %v273
    %v693 = vunpack.c.h.b16 %v273
    %v694 = vunpack.c.l.b16 %v274
    %v695 = vunpack.c.h.b16 %v274
    %v696 = vunpack.c.l.b16 %v275
    %v697 = vunpack.c.h.b16 %v275
    %v698 = vunpack.c.l.b16 %v276
    %v699 = vunpack.c.h.b16 %v276
    %v700 = vunpack.c.l.b16 %v277
    %v701 = vunpack.c.h.b16 %v277
    %v702 = vunpack.c.l.b16 %v278
    %v703 = vunpack.c.h.b16 %v278
    %v704 = vunpack.c.l.b16 %v279
    %v705 = vunpack.c.h.b16 %v279
    %v706 = vunpack.c.l.b16 %v280
    %v707 = vunpack.c.h.b16 %v280
    %v708 = vunpack.c.l.b16 %v281
    %v709 = vunpack.c.h.b16 %v281
    %v710 = vunpack.c.l.b16 %v282
    %v711 = vunpack.c.h.b16 %v282
    %v712 = vunpack.c.l.b16 %v283
    %v713 = vunpack.c.h.b16 %v283
    %v714 = vunpack.c.l.b16 %v284
    %v715 = vunpack.c.h.b16 %v284
    %v716 = vunpack.c.l.b16 %v285
    %v717 = vunpack.c.h.b16 %v285
    %v718 = vpack.c.b16 %v436, %v430
    %v719 = vpack.c.b16 %v437, %v431
    %v720 = vpack.c.b16 %v438, %v432
    %v721 = vpack.c.b16 %v439, %v433
    %v722 = vpack.c.b16 %v440, %v434
    %v723 = vpack.c.b16 %v441, %v435
    %v724 = vpack.c.b16 %v448, %v442
    %v725 = vpack.c.b16 %v449, %v443
    %v726 = vpack.c.b16 %v450, %v444
    %v727 = vpack.c.b16 %v451, %v445
    %v728 = vpack.c.b16 %v452, %v446
    %v729 = vpack.c.b16 %v453, %v447
    %v730 = vpack.c.b16 %v460, %v454
    %v731 = vpack.c.b16 %v461, %v455
    %v732 = vpack.c.b16 %v462, %v456
    %v733 = vpack.c.b16 %v463, %v457
    %v734 = vpack.c.b16 %v464, %v458
    %v735 = vpack.c.b16 %v465, %v459
    %v736 = vpack.c.b16 %v472, %v466
    %v737 = vpack.c.b16 %v473, %v467
    %v738 = vpack.c.b16 %v474, %v468
    %v739 = vpack.c.b16 %v475, %v469
    %v740 = vpack.c.b16 %v476, %v470
    %v741 = vpack.c.b16 %v477, %v471
    %v742 = vpack.c.b16 %v484, %v478
    %v743 = vpack.c.b16 %v485, %v479
    %v744 = vpack.c.b16 %v486, %v480
    %v745 = vpack.c.b16 %v487, %v481
    %v746 = vpack.c.b16 %v488, %v482
    %v747 = vpack.c.b16 %v489, %v483
    %v748 = vpack.c.b16 %v496, %v490
    %v749 = vpack.c.b16 %v497, %v491
    %v750 = vpack.c.b16 %v498, %v492
    %v751 = vpack.c.b16 %v499, %v493
    %v752 = vpack.c.b16 %v500, %v494
    %v753 = vpack.c.b16 %v501, %v495
    %v754 = vpack.c.b16 %v508, %v502
    %v755 = vpack.c.b16 %v509, %v503
    %v756 = vpack.c.b16 %v510, %v504
    %v757 = vpack.c.b16 %v511, %v505
    %v758 = vpack.c.b16 %v512, %v506
    %v759 = vpack.c.b16 %v513, %v507
    %v760 = vpack.c.b16 %v520, %v514
    %v761 = vpack.c.b16 %v521, %v515
    %v762 = vpack.c.b16 %v522, %v516
    %v763 = vpack.c.b16 %v523, %v517
    %v764 = vpack.c.b16 %v524, %v518
    %v765 = vpack.c.b16 %v525, %v519
    %v766 = vpack.c.b16 %v532, %v526
    %v767 = vpack.c.b16 %v533, %v527
    %v768 = vpack.c.b16 %v534, %v528
    %v769 = vpack.c.b16 %v535, %v529
    %v770 = vpack.c.b16 %v536, %v530
    %v771 = vpack.c.b16 %v537, %v531
    %v772 = vpack.c.b16 %v544, %v538
    %v773 = vpack.c.b16 %v545, %v539
    %v774 = vpack.c.b16 %v546, %v540
    %v775 = vpack.c.b16 %v547, %v541
    %v776 = vpack.c.b16 %v548, %v542
    %v777 = vpack.c.b16 %v549, %v543
    %v778 = vpack.c.b16 %v556, %v550
    %v779 = vpack.c.b16 %v557, %v551
    %v780 = vpack.c.b16 %v558, %v552
    %v781 = vpack.c.b16 %v559, %v553
    %v782 = vpack.c.b16 %v560, %v554
    %v783 = vpack.c.b16 %v561, %v555
    %v784 = vpack.c.b16 %v568, %v562
    %v785 = vpack.c.b16 %v569, %v563
    %v786 = vpack.c.b16 %v570, %v564
    %v787 = vpack.c.b16 %v571, %v565
    %v788 = vpack.c.b16 %v572, %v566
    %v789 = vpack.c.b16 %v573, %v567
    %v790 = vpack.c.b16 %v580, %v574
    %v791 = vpack.c.b16 %v581, %v575
    %v792 = vpack.c.b16 %v582, %v576
    %v793 = vpack.c.b16 %v583, %v577
    %v794 = vpack.c.b16 %v584, %v578
    %v795 = vpack.c.b16 %v585, %v579
    %v796 = vpack.c.b16 %v592, %v586
    %v797 = vpack.c.b16 %v593, %v587
    %v798 = vpack.c.b16 %v594, %v588
    %v799 = vpack.c.b16 %v595, %v589
    %v800 = vpack.c.b16 %v596, %v590
    %v801 = vpack.c.b16 %v597, %v591
    %v802 = vpack.c.b16 %v604, %v598
    %v803 = vpack.c.b16 %v605, %v599
    %v804 = vpack.c.b16 %v606, %v600
    %v805 = vpack.c.b16 %v607, %v601
    %v806 = vpack.c.b16 %v608, %v602
    %v807 = vpack.c.b16 %v609, %v603
    %v808 = vpack.c.b16 %v616, %v610
    %v809 = vpack.c.b16 %v617, %v611
    %v810 = vpack.c.b16 %v618, %v612
    %v811 = vpack.c.b16 %v619, %v613
    %v812 = vpack.c.b16 %v620, %v614
    %v813 = vpack.c.b16 %v621, %v615
    %v814 = vpack.c.b16 %v628, %v622
    %v815 = vpack.c.b16 %v629, %v623
    %v816 = vpack.c.b16 %v630, %v624
    %v817 = vpack.c.b16 %v631, %v625
    %v818 = vpack.c.b16 %v632, %v626
    %v819 = vpack.c.b16 %v633, %v627
    %v820 = vpack.c.b16 %v640, %v634
    %v821 = vpack.c.b16 %v641, %v635
    %v822 = vpack.c.b16 %v642, %v636
    %v823 = vpack.c.b16 %v643, %v637
    %v824 = vpack.c.b16 %v644, %v638
    %v825 = vpack.c.b16 %v645, %v639
    %v826 = vpack.c.b16 %v652, %v646
    %v827 = vpack.c.b16 %v653, %v647
    %v828 = vpack.c.b16 %v654, %v648
    %v829 = vpack.c.b16 %v655, %v649
    %v830 = vpack.c.b16 %v656, %v650
    %v831 = vpack.c.b16 %v657, %v651
    %v832 = vpack.c.b16 %v664, %v658
    %v833 = vpack.c.b16 %v665, %v659
    %v834 = vpack.c.b16 %v666, %v660
    %v835 = vpack.c.b16 %v667, %v661
    %v836 = vpack.c.b16 %v668, %v662
    %v837 = vpack.c.b16 %v669, %v663
    %v838 = vpack.c.b16 %v676, %v670
    %v839 = vpack.c.b16 %v677, %v671
    %v840 = vpack.c.b16 %v678, %v672
    %v841 = vpack.c.b16 %v679, %v673
    %v842 = vpack.c.b16 %v680, %v674
    %v843 = vpack.c.b16 %v681, %v675
    %v844 = vpack.c.b16 %v688, %v682
    %v845 = vpack.c.b16 %v689, %v683
    %v846 = vpack.c.b16 %v690, %v684
    %v847 = vpack.c.b16 %v691, %v685
    %v848 = vpack.c.b16 %v692, %v686
    %v849 = vpack.c.b16 %v693, %v687
    %v850 = vpack.c.b16 %v700, %v694
    %v851 = vpack.c.b16 %v701, %v695
    %v852 = vpack.c.b16 %v702, %v696
    %v853 = vpack.c.b16 %v703, %v697
    %v854 = vpack.c.b16 %v704, %v698
    %v855 = vpack.c.b16 %v705, %v699
    %v856 = vpack.c.b16 %v712, %v706
    %v857 = vpack.c.b16 %v713, %v707
    %v858 = vpack.c.b16 %v714, %v708
    %v859 = vpack.c.b16 %v715, %v709
    %v860 = vpack.c.b16 %v716, %v710
    %v861 = vpack.c.b16 %v717, %v711
    %1006 = vmatprep.subr.bf16.mxu0 %v761
    %1007 = vmatpush1.bf16.msra.mxu0 %v760
    %1008 = vmatprep.subr.bf16.mxu0 %v755
    %1009 = vmatpush1.bf16.msra.mxu0 %v754
    %1010 = vmatprep.subr.bf16.mxu0 %v749
    %1011 = vmatpush1.bf16.msra.mxu0 %v748
    %1012 = vmatprep.subr.bf16.mxu0 %v743
    %1013 = vmatpush1.bf16.msra.mxu0 %v742
    %1014 = vmatprep.subr.bf16.mxu0 %v737
    %1015 = vmatpush1.bf16.msra.mxu0 %v736
    %1016 = vmatprep.subr.bf16.mxu0 %v731
    %1017 = vmatpush1.bf16.msra.mxu0 %v730
    %1018 = vmatprep.subr.bf16.mxu0 %v725
    %1019 = vmatpush1.bf16.msra.mxu0 %v724
    %1020 = vmatprep.subr.bf16.mxu0 %v719
    %1021 = vmatpush1.bf16.msra.mxu0 %v718
    %1022 = vmatprep.subr.bf16.mxu0 %v809
    %1023 = vmatpush2.bf16.msra.mxu0 %v808
    %1024 = vmatprep.subr.bf16.mxu0 %v803
    %1025 = vmatpush2.bf16.msra.mxu0 %v802
    %1026 = vmatprep.subr.bf16.mxu0 %v797
    %1027 = vmatpush2.bf16.msra.mxu0 %v796
    %1028 = vmatprep.subr.bf16.mxu0 %v791
    %1029 = vmatpush2.bf16.msra.mxu0 %v790
    %1030 = vmatprep.subr.bf16.mxu0 %v785
    %1031 = vmatpush2.bf16.msra.mxu0 %v784
    %1032 = vmatprep.subr.bf16.mxu0 %v779
    %1033 = vmatpush2.bf16.msra.mxu0 %v778
    %1034 = vmatprep.subr.bf16.mxu0 %v773
    %1035 = vmatpush2.bf16.msra.mxu0 %v772
    %1036 = vmatprep.subr.bf16.mxu0 %v767
    %1037 = vmatpush2.bf16.msra.mxu0 %v766
    %1038 = vmatprep.mubr.bf16.mxu0 %v140
    %1039 = vmatmul.mubr.bf16.gmra.mxu0 %v139
    %v1040 = vpop.f32.mrf.mxu0
    %v1041 = vadd.f32 0.0, %v1040
    %v1042 = vpop.f32.mrf.mxu0
    %v1043 = vadd.f32 0.0, %v1042
    %v1044 = vpop.f32.mrf.mxu0
    %v1045 = vpop.f32.mrf.mxu0
    %1046 = vdwg.mxu0
    %1047 = vmatprep.subr.bf16.mxu0 %v857
    %1048 = vmatpush1.bf16.msra.mxu0 %v856
    %1049 = vmatprep.subr.bf16.mxu0 %v851
    %1050 = vmatpush1.bf16.msra.mxu0 %v850
    %1051 = vmatprep.subr.bf16.mxu0 %v845
    %1052 = vmatpush1.bf16.msra.mxu0 %v844
    %1053 = vmatprep.subr.bf16.mxu0 %v839
    %1054 = vmatpush1.bf16.msra.mxu0 %v838
    %1055 = vmatprep.subr.bf16.mxu0 %v833
    %1056 = vmatpush1.bf16.msra.mxu0 %v832
    %1057 = vmatprep.subr.bf16.mxu0 %v827
    %1058 = vmatpush1.bf16.msra.mxu0 %v826
    %1059 = vmatprep.subr.bf16.mxu0 %v821
    %1060 = vmatpush1.bf16.msra.mxu0 %v820
    %1061 = vmatprep.subr.bf16.mxu0 %v815
    %1062 = vmatpush1.bf16.msra.mxu0 %v814
    %1063 = vmatprep.subr.bf16.mxu0 0
    %1064 = vmatpush2.bf16.msra.mxu0 0
    %1065 = vmatprep.subr.bf16.mxu0 0
    %1066 = vmatpush2.bf16.msra.mxu0 0
    %1067 = vmatprep.subr.bf16.mxu0 0
    %1068 = vmatpush2.bf16.msra.mxu0 0
    %1069 = vmatprep.subr.bf16.mxu0 0
    %1070 = vmatpush2.bf16.msra.mxu0 0
    %1071 = vmatprep.subr.bf16.mxu0 0
    %1072 = vmatpush2.bf16.msra.mxu0 0
    %1073 = vmatprep.subr.bf16.mxu0 0
    %1074 = vmatpush2.bf16.msra.mxu0 0
    %1075 = vmatprep.subr.bf16.mxu0 0
    %1076 = vmatpush2.bf16.msra.mxu0 0
    %1077 = vmatprep.subr.bf16.mxu0 0
    %1078 = vmatpush2.bf16.msra.mxu0 0
    %1079 = vmatprep.mubr.bf16.mxu0 0
    %1080 = vmatmul.mubr.bf16.gmra.mxu0 %v141
    %v1081 = vpop.f32.mrf.mxu0
    %v1082 = vadd.f32 %v1041, %v1081
    %v1083 = vpop.f32.mrf.mxu0
    %v1084 = vadd.f32 %v1043, %v1083
    %v1085 = vpop.f32.mrf.mxu0
    %v1086 = vpop.f32.mrf.mxu0
    %1087 = vdwg.mxu0
    %1088 = vmatprep.subr.bf16.mxu0 %v763
    %1089 = vmatpush1.bf16.msra.mxu0 %v762
    %1090 = vmatprep.subr.bf16.mxu0 %v757
    %1091 = vmatpush1.bf16.msra.mxu0 %v756
    %1092 = vmatprep.subr.bf16.mxu0 %v751
    %1093 = vmatpush1.bf16.msra.mxu0 %v750
    %1094 = vmatprep.subr.bf16.mxu0 %v745
    %1095 = vmatpush1.bf16.msra.mxu0 %v744
    %1096 = vmatprep.subr.bf16.mxu0 %v739
    %1097 = vmatpush1.bf16.msra.mxu0 %v738
    %1098 = vmatprep.subr.bf16.mxu0 %v733
    %1099 = vmatpush1.bf16.msra.mxu0 %v732
    %1100 = vmatprep.subr.bf16.mxu0 %v727
    %1101 = vmatpush1.bf16.msra.mxu0 %v726
    %1102 = vmatprep.subr.bf16.mxu0 %v721
    %1103 = vmatpush1.bf16.msra.mxu0 %v720
    %1104 = vmatprep.subr.bf16.mxu0 %v811
    %1105 = vmatpush2.bf16.msra.mxu0 %v810
    %1106 = vmatprep.subr.bf16.mxu0 %v805
    %1107 = vmatpush2.bf16.msra.mxu0 %v804
    %1108 = vmatprep.subr.bf16.mxu0 %v799
    %1109 = vmatpush2.bf16.msra.mxu0 %v798
    %1110 = vmatprep.subr.bf16.mxu0 %v793
    %1111 = vmatpush2.bf16.msra.mxu0 %v792
    %1112 = vmatprep.subr.bf16.mxu0 %v787
    %1113 = vmatpush2.bf16.msra.mxu0 %v786
    %1114 = vmatprep.subr.bf16.mxu0 %v781
    %1115 = vmatpush2.bf16.msra.mxu0 %v780
    %1116 = vmatprep.subr.bf16.mxu0 %v775
    %1117 = vmatpush2.bf16.msra.mxu0 %v774
    %1118 = vmatprep.subr.bf16.mxu0 %v769
    %1119 = vmatpush2.bf16.msra.mxu0 %v768
    %1120 = vmatprep.mubr.bf16.mxu0 %v140
    %1121 = vmatmul.mubr.bf16.gmra.mxu0 %v139
    %v1122 = vpop.f32.mrf.mxu0
    %v1123 = vadd.f32 0.0, %v1122
    %v1124 = vpop.f32.mrf.mxu0
    %v1125 = vadd.f32 0.0, %v1124
    %v1126 = vpop.f32.mrf.mxu0
    %v1127 = vpop.f32.mrf.mxu0
    %1128 = vdwg.mxu0
    %1129 = vmatprep.subr.bf16.mxu0 %v859
    %1130 = vmatpush1.bf16.msra.mxu0 %v858
    %1131 = vmatprep.subr.bf16.mxu0 %v853
    %1132 = vmatpush1.bf16.msra.mxu0 %v852
    %1133 = vmatprep.subr.bf16.mxu0 %v847
    %1134 = vmatpush1.bf16.msra.mxu0 %v846
    %1135 = vmatprep.subr.bf16.mxu0 %v841
    %1136 = vmatpush1.bf16.msra.mxu0 %v840
    %1137 = vmatprep.subr.bf16.mxu0 %v835
    %1138 = vmatpush1.bf16.msra.mxu0 %v834
    %1139 = vmatprep.subr.bf16.mxu0 %v829
    %1140 = vmatpush1.bf16.msra.mxu0 %v828
    %1141 = vmatprep.subr.bf16.mxu0 %v823
    %1142 = vmatpush1.bf16.msra.mxu0 %v822
    %1143 = vmatprep.subr.bf16.mxu0 %v817
    %1144 = vmatpush1.bf16.msra.mxu0 %v816
    %1145 = vmatprep.subr.bf16.mxu0 0
    %1146 = vmatpush2.bf16.msra.mxu0 0
    %1147 = vmatprep.subr.bf16.mxu0 0
    %1148 = vmatpush2.bf16.msra.mxu0 0
    %1149 = vmatprep.subr.bf16.mxu0 0
    %1150 = vmatpush2.bf16.msra.mxu0 0
    %1151 = vmatprep.subr.bf16.mxu0 0
    %1152 = vmatpush2.bf16.msra.mxu0 0
    %1153 = vmatprep.subr.bf16.mxu0 0
    %1154 = vmatpush2.bf16.msra.mxu0 0
    %1155 = vmatprep.subr.bf16.mxu0 0
    %1156 = vmatpush2.bf16.msra.mxu0 0
    %1157 = vmatprep.subr.bf16.mxu0 0
    %1158 = vmatpush2.bf16.msra.mxu0 0
    %1159 = vmatprep.subr.bf16.mxu0 0
    %1160 = vmatpush2.bf16.msra.mxu0 0
    %1161 = vmatprep.mubr.bf16.mxu0 0
    %1162 = vmatmul.mubr.bf16.gmra.mxu0 %v141
    %v1163 = vpop.f32.mrf.mxu0
    %v1164 = vadd.f32 %v1123, %v1163
    %v1165 = vpop.f32.mrf.mxu0
    %v1166 = vadd.f32 %v1125, %v1165
    %v1167 = vpop.f32.mrf.mxu0
    %v1168 = vpop.f32.mrf.mxu0
    %1169 = vdwg.mxu0
    %1170 = vmatprep.subr.bf16.mxu0 %v765
    %1171 = vmatpush1.bf16.msra.mxu0 %v764
    %1172 = vmatprep.subr.bf16.mxu0 %v759
    %1173 = vmatpush1.bf16.msra.mxu0 %v758
    %1174 = vmatprep.subr.bf16.mxu0 %v753
    %1175 = vmatpush1.bf16.msra.mxu0 %v752
    %1176 = vmatprep.subr.bf16.mxu0 %v747
    %1177 = vmatpush1.bf16.msra.mxu0 %v746
    %1178 = vmatprep.subr.bf16.mxu0 %v741
    %1179 = vmatpush1.bf16.msra.mxu0 %v740
    %1180 = vmatprep.subr.bf16.mxu0 %v735
    %1181 = vmatpush1.bf16.msra.mxu0 %v734
    %1182 = vmatprep.subr.bf16.mxu0 %v729
    %1183 = vmatpush1.bf16.msra.mxu0 %v728
    %1184 = vmatprep.subr.bf16.mxu0 %v723
    %1185 = vmatpush1.bf16.msra.mxu0 %v722
    %1186 = vmatprep.subr.bf16.mxu0 %v813
    %1187 = vmatpush2.bf16.msra.mxu0 %v812
    %1188 = vmatprep.subr.bf16.mxu0 %v807
    %1189 = vmatpush2.bf16.msra.mxu0 %v806
    %1190 = vmatprep.subr.bf16.mxu0 %v801
    %1191 = vmatpush2.bf16.msra.mxu0 %v800
    %1192 = vmatprep.subr.bf16.mxu0 %v795
    %1193 = vmatpush2.bf16.msra.mxu0 %v794
    %1194 = vmatprep.subr.bf16.mxu0 %v789
    %1195 = vmatpush2.bf16.msra.mxu0 %v788
    %1196 = vmatprep.subr.bf16.mxu0 %v783
    %1197 = vmatpush2.bf16.msra.mxu0 %v782
    %1198 = vmatprep.subr.bf16.mxu0 %v777
    %1199 = vmatpush2.bf16.msra.mxu0 %v776
    %1200 = vmatprep.subr.bf16.mxu0 %v771
    %1201 = vmatpush2.bf16.msra.mxu0 %v770
    %1202 = vmatprep.mubr.bf16.mxu0 %v140
    %1203 = vmatmul.mubr.bf16.gmra.mxu0 %v139
    %v1204 = vpop.f32.mrf.mxu0
    %v1205 = vadd.f32 0.0, %v1204
    %v1206 = vpop.f32.mrf.mxu0
    %v1207 = vadd.f32 0.0, %v1206
    %v1208 = vpop.f32.mrf.mxu0
    %v1209 = vpop.f32.mrf.mxu0
    %1210 = vdwg.mxu0
    %1211 = vmatprep.subr.bf16.mxu0 %v861
    %1212 = vmatpush1.bf16.msra.mxu0 %v860
    %1213 = vmatprep.subr.bf16.mxu0 %v855
    %1214 = vmatpush1.bf16.msra.mxu0 %v854
    %1215 = vmatprep.subr.bf16.mxu0 %v849
    %1216 = vmatpush1.bf16.msra.mxu0 %v848
    %1217 = vmatprep.subr.bf16.mxu0 %v843
    %1218 = vmatpush1.bf16.msra.mxu0 %v842
    %1219 = vmatprep.subr.bf16.mxu0 %v837
    %1220 = vmatpush1.bf16.msra.mxu0 %v836
    %1221 = vmatprep.subr.bf16.mxu0 %v831
    %1222 = vmatpush1.bf16.msra.mxu0 %v830
    %1223 = vmatprep.subr.bf16.mxu0 %v825
    %1224 = vmatpush1.bf16.msra.mxu0 %v824
    %1225 = vmatprep.subr.bf16.mxu0 %v819
    %1226 = vmatpush1.bf16.msra.mxu0 %v818
    %1227 = vmatprep.subr.bf16.mxu0 0
    %1228 = vmatpush2.bf16.msra.mxu0 0
    %1229 = vmatprep.subr.bf16.mxu0 0
    %1230 = vmatpush2.bf16.msra.mxu0 0
    %1231 = vmatprep.subr.bf16.mxu0 0
    %1232 = vmatpush2.bf16.msra.mxu0 0
    %1233 = vmatprep.subr.bf16.mxu0 0
    %1234 = vmatpush2.bf16.msra.mxu0 0
    %1235 = vmatprep.subr.bf16.mxu0 0
    %1236 = vmatpush2.bf16.msra.mxu0 0
    %1237 = vmatprep.subr.bf16.mxu0 0
    %1238 = vmatpush2.bf16.msra.mxu0 0
    %1239 = vmatprep.subr.bf16.mxu0 0
    %1240 = vmatpush2.bf16.msra.mxu0 0
    %1241 = vmatprep.subr.bf16.mxu0 0
    %1242 = vmatpush2.bf16.msra.mxu0 0
    %1243 = vmatprep.mubr.bf16.mxu0 0
    %1244 = vmatmul.mubr.bf16.gmra.mxu0 %v141
    %v1245 = vpop.f32.mrf.mxu0
    %v1246 = vadd.f32 %v1205, %v1245
    %v1247 = vpop.f32.mrf.mxu0
    %v1248 = vadd.f32 %v1207, %v1247
    %v1249 = vpop.f32.mrf.mxu0
    %v1250 = vpop.f32.mrf.mxu0
    %1251 = vdwg.mxu0
    %v1252 = vpack.c.bf16 %v1082, %v1082
    %v1253 = vpack.c.bf16 %v1084, %v1084
    %v1254 = vpack.c.bf16 %v1164, %v1164
    %v1255 = vpack.c.bf16 %v1166, %v1166
    %v1256 = vpack.c.bf16 %v1246, %v1246
    %v1257 = vpack.c.bf16 %v1248, %v1248
    %v1258 = vld [vmem:[#allocation7] sm:$0xff]
    %v1259 = vld [vmem:[#allocation7 + $0x8] sm:$0xff]
    %v1260 = vld [vmem:[#allocation7 + $0x10] sm:$0xff]
    %v1261 = vld [vmem:[#allocation7 + $0x18] sm:$0xff]
    %v1262 = vld [vmem:[#allocation7 + $0x20] sm:$0xff]
    %v1263 = vld [vmem:[#allocation7 + $0x28] sm:$0xff]
    %v1264 = vld [vmem:[#allocation7 + $0x30] sm:$0xff]
    %v1265 = vld [vmem:[#allocation7 + $0x38] sm:$0xff]
    %v1266 = vld [vmem:[#allocation7 + $0x40] sm:$0xff]
    %v1267 = vld [vmem:[#allocation7 + $0x48] sm:$0xff]
    %v1268 = vld [vmem:[#allocation7 + $0x50] sm:$0xff]
    %v1269 = vld [vmem:[#allocation7 + $0x58] sm:$0xff]
    %v1270 = vld [vmem:[#allocation7 + $0x60] sm:$0xff]
    %v1271 = vld [vmem:[#allocation7 + $0x68] sm:$0xff]
    %v1272 = vld [vmem:[#allocation7 + $0x70] sm:$0xff]
    %v1273 = vld [vmem:[#allocation7 + $0x78] sm:$0xff]
    %v1274 = vld [vmem:[#allocation7 + $0x80] sm:$0xff]
    %v1275 = vld [vmem:[#allocation7 + $0x88] sm:$0xff]
    %v1276 = vld [vmem:[#allocation7 + $0x90] sm:$0xff]
    %v1277 = vld [vmem:[#allocation7 + $0x98] sm:$0xff]
    %v1278 = vld [vmem:[#allocation7 + $0xa0] sm:$0xff]
    %v1279 = vld [vmem:[#allocation7 + $0xa8] sm:$0xff]
    %v1280 = vld [vmem:[#allocation7 + $0xb0] sm:$0xff]
    %v1281 = vld [vmem:[#allocation7 + $0xb8] sm:$0xff]
    %v1282 = vld [vmem:[#allocation7 + $0xc0] sm:$0xff]
    %v1283 = vld [vmem:[#allocation7 + $0xc8] sm:$0xff]
    %v1284 = vld [vmem:[#allocation7 + $0xd0] sm:$0xff]
    %v1285 = vld [vmem:[#allocation7 + $0xd8] sm:$0xff]
    %v1286 = vld [vmem:[#allocation7 + $0xe0] sm:$0xff]
    %v1287 = vld [vmem:[#allocation7 + $0xe8] sm:$0xff]
    %v1288 = vld [vmem:[#allocation7 + $0xf0] sm:$0xff]
    %v1289 = vld [vmem:[#allocation7 + $0xf8] sm:$0xff]
    %v1290 = vld [vmem:[#allocation7 + $0x100] sm:$0xff]
    %v1291 = vld [vmem:[#allocation7 + $0x108] sm:$0xff]
    %v1292 = vld [vmem:[#allocation7 + $0x110] sm:$0xff]
    %v1293 = vld [vmem:[#allocation7 + $0x118] sm:$0xff]
    %v1294 = vld [vmem:[#allocation7 + $0x120] sm:$0xff]
    %v1295 = vld [vmem:[#allocation7 + $0x128] sm:$0xff]
    %v1296 = vld [vmem:[#allocation7 + $0x130] sm:$0xff]
    %v1297 = vld [vmem:[#allocation7 + $0x138] sm:$0xff]
    %v1298 = vld [vmem:[#allocation7 + $0x140] sm:$0xff]
    %v1299 = vld [vmem:[#allocation7 + $0x148] sm:$0xff]
    %v1300 = vld [vmem:[#allocation7 + $0x150] sm:$0xff]
    %v1301 = vld [vmem:[#allocation7 + $0x158] sm:$0xff]
    %v1302 = vld [vmem:[#allocation7 + $0x160] sm:$0xff]
    %v1303 = vld [vmem:[#allocation7 + $0x168] sm:$0xff]
    %v1304 = vld [vmem:[#allocation7 + $0x170] sm:$0xff]
    %v1305 = vld [vmem:[#allocation7 + $0x178] sm:$0xff]
    %v1306 = vld [vmem:[#allocation7 + $0x180] sm:$0xff]
    %v1307 = vld [vmem:[#allocation7 + $0x188] sm:$0xff]
    %v1308 = vld [vmem:[#allocation7 + $0x190] sm:$0xff]
    %v1309 = vld [vmem:[#allocation7 + $0x198] sm:$0xff]
    %v1310 = vld [vmem:[#allocation7 + $0x1a0] sm:$0xff]
    %v1311 = vld [vmem:[#allocation7 + $0x1a8] sm:$0xff]
    %v1312 = vld [vmem:[#allocation7 + $0x1b0] sm:$0xff]
    %v1313 = vld [vmem:[#allocation7 + $0x1b8] sm:$0xff]
    %v1314 = vld [vmem:[#allocation7 + $0x1c0] sm:$0xff]
    %v1315 = vld [vmem:[#allocation7 + $0x1c8] sm:$0xff]
    %v1316 = vld [vmem:[#allocation7 + $0x1d0] sm:$0xff]
    %v1317 = vld [vmem:[#allocation7 + $0x1d8] sm:$0xff]
    %v1318 = vld [vmem:[#allocation7 + $0x1e0] sm:$0xff]
    %v1319 = vld [vmem:[#allocation7 + $0x1e8] sm:$0xff]
    %v1320 = vld [vmem:[#allocation7 + $0x1f0] sm:$0xff]
    %v1321 = vld [vmem:[#allocation7 + $0x1f8] sm:$0xff]
    %v1322 = vld [vmem:[#allocation7 + $0x200] sm:$0xff]
    %v1323 = vld [vmem:[#allocation7 + $0x208] sm:$0xff]
    %v1324 = vld [vmem:[#allocation7 + $0x210] sm:$0xff]
    %v1325 = vld [vmem:[#allocation7 + $0x218] sm:$0xff]
    %v1326 = vld [vmem:[#allocation7 + $0x220] sm:$0xff]
    %v1327 = vld [vmem:[#allocation7 + $0x228] sm:$0xff]
    %v1328 = vld [vmem:[#allocation7 + $0x230] sm:$0xff]
    %v1329 = vld [vmem:[#allocation7 + $0x238] sm:$0xff]
    %v1330 = vld [vmem:[#allocation7 + $0x240] sm:$0xff]
    %v1331 = vld [vmem:[#allocation7 + $0x248] sm:$0xff]
    %v1332 = vld [vmem:[#allocation7 + $0x250] sm:$0xff]
    %v1333 = vld [vmem:[#allocation7 + $0x258] sm:$0xff]
    %v1334 = vld [vmem:[#allocation7 + $0x260] sm:$0xff]
    %v1335 = vld [vmem:[#allocation7 + $0x268] sm:$0xff]
    %v1336 = vld [vmem:[#allocation7 + $0x270] sm:$0xff]
    %v1337 = vld [vmem:[#allocation7 + $0x278] sm:$0xff]
    %v1338 = vld [vmem:[#allocation7 + $0x280] sm:$0xff]
    %v1339 = vld [vmem:[#allocation7 + $0x288] sm:$0xff]
    %v1340 = vld [vmem:[#allocation7 + $0x290] sm:$0xff]
    %v1341 = vld [vmem:[#allocation7 + $0x298] sm:$0xff]
    %v1342 = vld [vmem:[#allocation7 + $0x2a0] sm:$0xff]
    %v1343 = vld [vmem:[#allocation7 + $0x2a8] sm:$0xff]
    %v1344 = vld [vmem:[#allocation7 + $0x2b0] sm:$0xff]
    %v1345 = vld [vmem:[#allocation7 + $0x2b8] sm:$0xff]
    %v1346 = vld [vmem:[#allocation7 + $0x2c0] sm:$0xff]
    %v1347 = vld [vmem:[#allocation7 + $0x2c8] sm:$0xff]
    %v1348 = vld [vmem:[#allocation7 + $0x2d0] sm:$0xff]
    %v1349 = vld [vmem:[#allocation7 + $0x2d8] sm:$0xff]
    %v1350 = vld [vmem:[#allocation7 + $0x2e0] sm:$0xff]
    %v1351 = vld [vmem:[#allocation7 + $0x2e8] sm:$0xff]
    %v1352 = vld [vmem:[#allocation7 + $0x2f0] sm:$0xff]
    %v1353 = vld [vmem:[#allocation7 + $0x2f8] sm:$0xff]
    %v1354 = vld [vmem:[#allocation7 + $0x300] sm:$0xff]
    %v1355 = vld [vmem:[#allocation7 + $0x308] sm:$0xff]
    %v1356 = vld [vmem:[#allocation7 + $0x310] sm:$0xff]
    %v1357 = vld [vmem:[#allocation7 + $0x318] sm:$0xff]
    %v1358 = vld [vmem:[#allocation7 + $0x320] sm:$0xff]
    %v1359 = vld [vmem:[#allocation7 + $0x328] sm:$0xff]
    %v1360 = vld [vmem:[#allocation7 + $0x330] sm:$0xff]
    %v1361 = vld [vmem:[#allocation7 + $0x338] sm:$0xff]
    %v1362 = vld [vmem:[#allocation7 + $0x340] sm:$0xff]
    %v1363 = vld [vmem:[#allocation7 + $0x348] sm:$0xff]
    %v1364 = vld [vmem:[#allocation7 + $0x350] sm:$0xff]
    %v1365 = vld [vmem:[#allocation7 + $0x358] sm:$0xff]
    %v1366 = vld [vmem:[#allocation7 + $0x360] sm:$0xff]
    %v1367 = vld [vmem:[#allocation7 + $0x368] sm:$0xff]
    %v1368 = vld [vmem:[#allocation7 + $0x370] sm:$0xff]
    %v1369 = vld [vmem:[#allocation7 + $0x378] sm:$0xff]
    %v1370 = vld [vmem:[#allocation7 + $0x380] sm:$0xff]
    %v1371 = vld [vmem:[#allocation7 + $0x388] sm:$0xff]
    %v1372 = vld [vmem:[#allocation7 + $0x390] sm:$0xff]
    %v1373 = vld [vmem:[#allocation7 + $0x398] sm:$0xff]
    %v1374 = vld [vmem:[#allocation7 + $0x3a0] sm:$0xff]
    %v1375 = vld [vmem:[#allocation7 + $0x3a8] sm:$0xff]
    %v1376 = vld [vmem:[#allocation7 + $0x3b0] sm:$0xff]
    %v1377 = vld [vmem:[#allocation7 + $0x3b8] sm:$0xff]
    %v1378 = vld [vmem:[#allocation7 + $0x3c0] sm:$0xff]
    %v1379 = vld [vmem:[#allocation7 + $0x3c8] sm:$0xff]
    %v1380 = vld [vmem:[#allocation7 + $0x3d0] sm:$0xff]
    %v1381 = vld [vmem:[#allocation7 + $0x3d8] sm:$0xff]
    %v1382 = vld [vmem:[#allocation7 + $0x3e0] sm:$0xff]
    %v1383 = vld [vmem:[#allocation7 + $0x3e8] sm:$0xff]
    %v1384 = vld [vmem:[#allocation7 + $0x3f0] sm:$0xff]
    %v1385 = vld [vmem:[#allocation7 + $0x3f8] sm:$0xff]
    %v1386 = vld [vmem:[#allocation7 + $0x400] sm:$0xff]
    %v1387 = vld [vmem:[#allocation7 + $0x408] sm:$0xff]
    %v1388 = vld [vmem:[#allocation7 + $0x410] sm:$0xff]
    %v1389 = vld [vmem:[#allocation7 + $0x418] sm:$0xff]
    %v1390 = vld [vmem:[#allocation7 + $0x420] sm:$0xff]
    %v1391 = vld [vmem:[#allocation7 + $0x428] sm:$0xff]
    %v1392 = vld [vmem:[#allocation7 + $0x430] sm:$0xff]
    %v1393 = vld [vmem:[#allocation7 + $0x438] sm:$0xff]
    %v1394 = vld [vmem:[#allocation7 + $0x440] sm:$0xff]
    %v1395 = vld [vmem:[#allocation7 + $0x448] sm:$0xff]
    %v1396 = vld [vmem:[#allocation7 + $0x450] sm:$0xff]
    %v1397 = vld [vmem:[#allocation7 + $0x458] sm:$0xff]
    %v1398 = vld [vmem:[#allocation7 + $0x460] sm:$0xff]
    %v1399 = vld [vmem:[#allocation7 + $0x468] sm:$0xff]
    %v1400 = vld [vmem:[#allocation7 + $0x470] sm:$0xff]
    %v1401 = vld [vmem:[#allocation7 + $0x478] sm:$0xff]
    %v1402 = vld [vmem:[#allocation7 + $0x480] sm:$0xff]
    %v1403 = vld [vmem:[#allocation7 + $0x488] sm:$0xff]
    %v1404 = vld [vmem:[#allocation7 + $0x490] sm:$0xff]
    %v1405 = vld [vmem:[#allocation7 + $0x498] sm:$0xff]
    %v1406 = vld [vmem:[#allocation7 + $0x4a0] sm:$0xff]
    %v1407 = vld [vmem:[#allocation7 + $0x4a8] sm:$0xff]
    %v1408 = vld [vmem:[#allocation7 + $0x4b0] sm:$0xff]
    %v1409 = vld [vmem:[#allocation7 + $0x4b8] sm:$0xff]
    %v1410 = vld [vmem:[#allocation7 + $0x4c0] sm:$0xff]
    %v1411 = vld [vmem:[#allocation7 + $0x4c8] sm:$0xff]
    %v1412 = vld [vmem:[#allocation7 + $0x4d0] sm:$0xff]
    %v1413 = vld [vmem:[#allocation7 + $0x4d8] sm:$0xff]
    %v1414 = vld [vmem:[#allocation7 + $0x4e0] sm:$0xff]
    %v1415 = vld [vmem:[#allocation7 + $0x4e8] sm:$0xff]
    %v1416 = vld [vmem:[#allocation7 + $0x4f0] sm:$0xff]
    %v1417 = vld [vmem:[#allocation7 + $0x4f8] sm:$0xff]
    %v1418 = vld [vmem:[#allocation7 + $0x500] sm:$0xff]
    %v1419 = vld [vmem:[#allocation7 + $0x508] sm:$0xff]
    %v1420 = vld [vmem:[#allocation7 + $0x510] sm:$0xff]
    %v1421 = vld [vmem:[#allocation7 + $0x518] sm:$0xff]
    %v1422 = vld [vmem:[#allocation7 + $0x520] sm:$0xff]
    %v1423 = vld [vmem:[#allocation7 + $0x528] sm:$0xff]
    %v1424 = vld [vmem:[#allocation7 + $0x530] sm:$0xff]
    %v1425 = vld [vmem:[#allocation7 + $0x538] sm:$0xff]
    %v1426 = vld [vmem:[#allocation7 + $0x540] sm:$0xff]
    %v1427 = vld [vmem:[#allocation7 + $0x548] sm:$0xff]
    %v1428 = vld [vmem:[#allocation7 + $0x550] sm:$0xff]
    %v1429 = vld [vmem:[#allocation7 + $0x558] sm:$0xff]
    %v1430 = vld [vmem:[#allocation7 + $0x560] sm:$0xff]
    %v1431 = vld [vmem:[#allocation7 + $0x568] sm:$0xff]
    %v1432 = vld [vmem:[#allocation7 + $0x570] sm:$0xff]
    %v1433 = vld [vmem:[#allocation7 + $0x578] sm:$0xff]
    %v1434 = vld [vmem:[#allocation7 + $0x580] sm:$0xff]
    %v1435 = vld [vmem:[#allocation7 + $0x588] sm:$0xff]
    %v1436 = vld [vmem:[#allocation7 + $0x590] sm:$0xff]
    %v1437 = vld [vmem:[#allocation7 + $0x598] sm:$0xff]
    %v1438 = vld [vmem:[#allocation7 + $0x5a0] sm:$0xff]
    %v1439 = vld [vmem:[#allocation7 + $0x5a8] sm:$0xff]
    %v1440 = vld [vmem:[#allocation7 + $0x5b0] sm:$0xff]
    %v1441 = vld [vmem:[#allocation7 + $0x5b8] sm:$0xff]
    %v1442 = vld [vmem:[#allocation7 + $0x5c0] sm:$0xff]
    %v1443 = vld [vmem:[#allocation7 + $0x5c8] sm:$0xff]
    %v1444 = vld [vmem:[#allocation7 + $0x5d0] sm:$0xff]
    %v1445 = vld [vmem:[#allocation7 + $0x5d8] sm:$0xff]
    %v1446 = vld [vmem:[#allocation7 + $0x5e0] sm:$0xff]
    %v1447 = vld [vmem:[#allocation7 + $0x5e8] sm:$0xff]
    %v1448 = vld [vmem:[#allocation7 + $0x5f0] sm:$0xff]
    %v1449 = vld [vmem:[#allocation7 + $0x5f8] sm:$0xff]
    %v1450 = vld [vmem:[%s3] sm:$0xf]
    %v1452 = vlaneseq
    %v1453 = vshrl.u32 %v1452, 7
    %v1454 = vsub.s32 0, %v1453
    %v1455 = vrot.slane %v1450, %v1454
    %v1456 = vlaneseq
    %v1457 = vshrl.u32 %v1456, 7
    %v1458 = vsub.s32 1, %v1457
    %v1459 = vrot.slane %v1450, %v1458
    %v1460 = vlaneseq
    %v1461 = vshrl.u32 %v1460, 7
    %v1462 = vsub.s32 2, %v1461
    %v1463 = vrot.slane %v1450, %v1462
    %v1464 = vlaneseq
    %v1465 = vshrl.u32 %v1464, 7
    %v1466 = vsub.s32 3, %v1465
    %v1467 = vrot.slane %v1450, %v1466
    %v1664 = vunpack.c.l.b16 %v1258
    %v1665 = vunpack.c.h.b16 %v1258
    %v1666 = vunpack.c.l.b16 %v1259
    %v1667 = vunpack.c.h.b16 %v1259
    %v1668 = vunpack.c.l.b16 %v1260
    %v1669 = vunpack.c.h.b16 %v1260
    %v1670 = vunpack.c.l.b16 %v1261
    %v1671 = vunpack.c.h.b16 %v1261
    %v1672 = vunpack.c.l.b16 %v1262
    %v1673 = vunpack.c.h.b16 %v1262
    %v1674 = vunpack.c.l.b16 %v1263
    %v1675 = vunpack.c.h.b16 %v1263
    %v1676 = vunpack.c.l.b16 %v1264
    %v1677 = vunpack.c.h.b16 %v1264
    %v1678 = vunpack.c.l.b16 %v1265
    %v1679 = vunpack.c.h.b16 %v1265
    %v1680 = vunpack.c.l.b16 %v1266
    %v1681 = vunpack.c.h.b16 %v1266
    %v1682 = vunpack.c.l.b16 %v1267
    %v1683 = vunpack.c.h.b16 %v1267
    %v1684 = vunpack.c.l.b16 %v1268
    %v1685 = vunpack.c.h.b16 %v1268
    %v1686 = vunpack.c.l.b16 %v1269
    %v1687 = vunpack.c.h.b16 %v1269
    %v1688 = vunpack.c.l.b16 %v1270
    %v1689 = vunpack.c.h.b16 %v1270
    %v1690 = vunpack.c.l.b16 %v1271
    %v1691 = vunpack.c.h.b16 %v1271
    %v1692 = vunpack.c.l.b16 %v1272
    %v1693 = vunpack.c.h.b16 %v1272
    %v1694 = vunpack.c.l.b16 %v1273
    %v1695 = vunpack.c.h.b16 %v1273
    %v1696 = vunpack.c.l.b16 %v1274
    %v1697 = vunpack.c.h.b16 %v1274
    %v1698 = vunpack.c.l.b16 %v1275
    %v1699 = vunpack.c.h.b16 %v1275
    %v1700 = vunpack.c.l.b16 %v1276
    %v1701 = vunpack.c.h.b16 %v1276
    %v1702 = vunpack.c.l.b16 %v1277
    %v1703 = vunpack.c.h.b16 %v1277
    %v1704 = vunpack.c.l.b16 %v1278
    %v1705 = vunpack.c.h.b16 %v1278
    %v1706 = vunpack.c.l.b16 %v1279
    %v1707 = vunpack.c.h.b16 %v1279
    %v1708 = vunpack.c.l.b16 %v1280
    %v1709 = vunpack.c.h.b16 %v1280
    %v1710 = vunpack.c.l.b16 %v1281
    %v1711 = vunpack.c.h.b16 %v1281
    %v1712 = vunpack.c.l.b16 %v1282
    %v1713 = vunpack.c.h.b16 %v1282
    %v1714 = vunpack.c.l.b16 %v1283
    %v1715 = vunpack.c.h.b16 %v1283
    %v1716 = vunpack.c.l.b16 %v1284
    %v1717 = vunpack.c.h.b16 %v1284
    %v1718 = vunpack.c.l.b16 %v1285
    %v1719 = vunpack.c.h.b16 %v1285
    %v1720 = vunpack.c.l.b16 %v1286
    %v1721 = vunpack.c.h.b16 %v1286
    %v1722 = vunpack.c.l.b16 %v1287
    %v1723 = vunpack.c.h.b16 %v1287
    %v1724 = vunpack.c.l.b16 %v1288
    %v1725 = vunpack.c.h.b16 %v1288
    %v1726 = vunpack.c.l.b16 %v1289
    %v1727 = vunpack.c.h.b16 %v1289
    %v1728 = vunpack.c.l.b16 %v1290
    %v1729 = vunpack.c.h.b16 %v1290
    %v1730 = vunpack.c.l.b16 %v1291
    %v1731 = vunpack.c.h.b16 %v1291
    %v1732 = vunpack.c.l.b16 %v1292
    %v1733 = vunpack.c.h.b16 %v1292
    %v1734 = vunpack.c.l.b16 %v1293
    %v1735 = vunpack.c.h.b16 %v1293
    %v1736 = vunpack.c.l.b16 %v1294
    %v1737 = vunpack.c.h.b16 %v1294
    %v1738 = vunpack.c.l.b16 %v1295
    %v1739 = vunpack.c.h.b16 %v1295
    %v1740 = vunpack.c.l.b16 %v1296
    %v1741 = vunpack.c.h.b16 %v1296
    %v1742 = vunpack.c.l.b16 %v1297
    %v1743 = vunpack.c.h.b16 %v1297
    %v1744 = vunpack.c.l.b16 %v1298
    %v1745 = vunpack.c.h.b16 %v1298
    %v1746 = vunpack.c.l.b16 %v1299
    %v1747 = vunpack.c.h.b16 %v1299
    %v1748 = vunpack.c.l.b16 %v1300
    %v1749 = vunpack.c.h.b16 %v1300
    %v1750 = vunpack.c.l.b16 %v1301
    %v1751 = vunpack.c.h.b16 %v1301
    %v1752 = vunpack.c.l.b16 %v1302
    %v1753 = vunpack.c.h.b16 %v1302
    %v1754 = vunpack.c.l.b16 %v1303
    %v1755 = vunpack.c.h.b16 %v1303
    %v1756 = vunpack.c.l.b16 %v1304
    %v1757 = vunpack.c.h.b16 %v1304
    %v1758 = vunpack.c.l.b16 %v1305
    %v1759 = vunpack.c.h.b16 %v1305
    %v1760 = vunpack.c.l.b16 %v1306
    %v1761 = vunpack.c.h.b16 %v1306
    %v1762 = vunpack.c.l.b16 %v1307
    %v1763 = vunpack.c.h.b16 %v1307
    %v1764 = vunpack.c.l.b16 %v1308
    %v1765 = vunpack.c.h.b16 %v1308
    %v1766 = vunpack.c.l.b16 %v1309
    %v1767 = vunpack.c.h.b16 %v1309
    %v1768 = vunpack.c.l.b16 %v1310
    %v1769 = vunpack.c.h.b16 %v1310
    %v1770 = vunpack.c.l.b16 %v1311
    %v1771 = vunpack.c.h.b16 %v1311
    %v1772 = vunpack.c.l.b16 %v1312
    %v1773 = vunpack.c.h.b16 %v1312
    %v1774 = vunpack.c.l.b16 %v1313
    %v1775 = vunpack.c.h.b16 %v1313
    %v1776 = vunpack.c.l.b16 %v1314
    %v1777 = vunpack.c.h.b16 %v1314
    %v1778 = vunpack.c.l.b16 %v1315
    %v1779 = vunpack.c.h.b16 %v1315
    %v1780 = vunpack.c.l.b16 %v1316
    %v1781 = vunpack.c.h.b16 %v1316
    %v1782 = vunpack.c.l.b16 %v1317
    %v1783 = vunpack.c.h.b16 %v1317
    %v1784 = vunpack.c.l.b16 %v1318
    %v1785 = vunpack.c.h.b16 %v1318
    %v1786 = vunpack.c.l.b16 %v1319
    %v1787 = vunpack.c.h.b16 %v1319
    %v1788 = vunpack.c.l.b16 %v1320
    %v1789 = vunpack.c.h.b16 %v1320
    %v1790 = vunpack.c.l.b16 %v1321
    %v1791 = vunpack.c.h.b16 %v1321
    %v1792 = vunpack.c.l.b16 %v1322
    %v1793 = vunpack.c.h.b16 %v1322
    %v1794 = vunpack.c.l.b16 %v1323
    %v1795 = vunpack.c.h.b16 %v1323
    %v1796 = vunpack.c.l.b16 %v1324
    %v1797 = vunpack.c.h.b16 %v1324
    %v1798 = vunpack.c.l.b16 %v1325
    %v1799 = vunpack.c.h.b16 %v1325
    %v1800 = vunpack.c.l.b16 %v1326
    %v1801 = vunpack.c.h.b16 %v1326
    %v1802 = vunpack.c.l.b16 %v1327
    %v1803 = vunpack.c.h.b16 %v1327
    %v1804 = vunpack.c.l.b16 %v1328
    %v1805 = vunpack.c.h.b16 %v1328
    %v1806 = vunpack.c.l.b16 %v1329
    %v1807 = vunpack.c.h.b16 %v1329
    %v1808 = vunpack.c.l.b16 %v1330
    %v1809 = vunpack.c.h.b16 %v1330
    %v1810 = vunpack.c.l.b16 %v1331
    %v1811 = vunpack.c.h.b16 %v1331
    %v1812 = vunpack.c.l.b16 %v1332
    %v1813 = vunpack.c.h.b16 %v1332
    %v1814 = vunpack.c.l.b16 %v1333
    %v1815 = vunpack.c.h.b16 %v1333
    %v1816 = vunpack.c.l.b16 %v1334
    %v1817 = vunpack.c.h.b16 %v1334
    %v1818 = vunpack.c.l.b16 %v1335
    %v1819 = vunpack.c.h.b16 %v1335
    %v1820 = vunpack.c.l.b16 %v1336
    %v1821 = vunpack.c.h.b16 %v1336
    %v1822 = vunpack.c.l.b16 %v1337
    %v1823 = vunpack.c.h.b16 %v1337
    %v1824 = vunpack.c.l.b16 %v1338
    %v1825 = vunpack.c.h.b16 %v1338
    %v1826 = vunpack.c.l.b16 %v1339
    %v1827 = vunpack.c.h.b16 %v1339
    %v1828 = vunpack.c.l.b16 %v1340
    %v1829 = vunpack.c.h.b16 %v1340
    %v1830 = vunpack.c.l.b16 %v1341
    %v1831 = vunpack.c.h.b16 %v1341
    %v1832 = vunpack.c.l.b16 %v1342
    %v1833 = vunpack.c.h.b16 %v1342
    %v1834 = vunpack.c.l.b16 %v1343
    %v1835 = vunpack.c.h.b16 %v1343
    %v1836 = vunpack.c.l.b16 %v1344
    %v1837 = vunpack.c.h.b16 %v1344
    %v1838 = vunpack.c.l.b16 %v1345
    %v1839 = vunpack.c.h.b16 %v1345
    %v1840 = vunpack.c.l.b16 %v1346
    %v1841 = vunpack.c.h.b16 %v1346
    %v1842 = vunpack.c.l.b16 %v1347
    %v1843 = vunpack.c.h.b16 %v1347
    %v1844 = vunpack.c.l.b16 %v1348
    %v1845 = vunpack.c.h.b16 %v1348
    %v1846 = vunpack.c.l.b16 %v1349
    %v1847 = vunpack.c.h.b16 %v1349
    %v1848 = vunpack.c.l.b16 %v1350
    %v1849 = vunpack.c.h.b16 %v1350
    %v1850 = vunpack.c.l.b16 %v1351
    %v1851 = vunpack.c.h.b16 %v1351
    %v1852 = vunpack.c.l.b16 %v1352
    %v1853 = vunpack.c.h.b16 %v1352
    %v1854 = vunpack.c.l.b16 %v1353
    %v1855 = vunpack.c.h.b16 %v1353
    %v1856 = vunpack.c.l.b16 %v1354
    %v1857 = vunpack.c.h.b16 %v1354
    %v1858 = vunpack.c.l.b16 %v1355
    %v1859 = vunpack.c.h.b16 %v1355
    %v1860 = vunpack.c.l.b16 %v1356
    %v1861 = vunpack.c.h.b16 %v1356
    %v1862 = vunpack.c.l.b16 %v1357
    %v1863 = vunpack.c.h.b16 %v1357
    %v1864 = vunpack.c.l.b16 %v1358
    %v1865 = vunpack.c.h.b16 %v1358
    %v1866 = vunpack.c.l.b16 %v1359
    %v1867 = vunpack.c.h.b16 %v1359
    %v1868 = vunpack.c.l.b16 %v1360
    %v1869 = vunpack.c.h.b16 %v1360
    %v1870 = vunpack.c.l.b16 %v1361
    %v1871 = vunpack.c.h.b16 %v1361
    %v1872 = vunpack.c.l.b16 %v1362
    %v1873 = vunpack.c.h.b16 %v1362
    %v1874 = vunpack.c.l.b16 %v1363
    %v1875 = vunpack.c.h.b16 %v1363
    %v1876 = vunpack.c.l.b16 %v1364
    %v1877 = vunpack.c.h.b16 %v1364
    %v1878 = vunpack.c.l.b16 %v1365
    %v1879 = vunpack.c.h.b16 %v1365
    %v1880 = vunpack.c.l.b16 %v1366
    %v1881 = vunpack.c.h.b16 %v1366
    %v1882 = vunpack.c.l.b16 %v1367
    %v1883 = vunpack.c.h.b16 %v1367
    %v1884 = vunpack.c.l.b16 %v1368
    %v1885 = vunpack.c.h.b16 %v1368
    %v1886 = vunpack.c.l.b16 %v1369
    %v1887 = vunpack.c.h.b16 %v1369
    %v1888 = vunpack.c.l.b16 %v1370
    %v1889 = vunpack.c.h.b16 %v1370
    %v1890 = vunpack.c.l.b16 %v1371
    %v1891 = vunpack.c.h.b16 %v1371
    %v1892 = vunpack.c.l.b16 %v1372
    %v1893 = vunpack.c.h.b16 %v1372
    %v1894 = vunpack.c.l.b16 %v1373
    %v1895 = vunpack.c.h.b16 %v1373
    %v1896 = vunpack.c.l.b16 %v1374
    %v1897 = vunpack.c.h.b16 %v1374
    %v1898 = vunpack.c.l.b16 %v1375
    %v1899 = vunpack.c.h.b16 %v1375
    %v1900 = vunpack.c.l.b16 %v1376
    %v1901 = vunpack.c.h.b16 %v1376
    %v1902 = vunpack.c.l.b16 %v1377
    %v1903 = vunpack.c.h.b16 %v1377
    %v1904 = vunpack.c.l.b16 %v1378
    %v1905 = vunpack.c.h.b16 %v1378
    %v1906 = vunpack.c.l.b16 %v1379
    %v1907 = vunpack.c.h.b16 %v1379
    %v1908 = vunpack.c.l.b16 %v1380
    %v1909 = vunpack.c.h.b16 %v1380
    %v1910 = vunpack.c.l.b16 %v1381
    %v1911 = vunpack.c.h.b16 %v1381
    %v1912 = vunpack.c.l.b16 %v1382
    %v1913 = vunpack.c.h.b16 %v1382
    %v1914 = vunpack.c.l.b16 %v1383
    %v1915 = vunpack.c.h.b16 %v1383
    %v1916 = vunpack.c.l.b16 %v1384
    %v1917 = vunpack.c.h.b16 %v1384
    %v1918 = vunpack.c.l.b16 %v1385
    %v1919 = vunpack.c.h.b16 %v1385
    %v1920 = vunpack.c.l.b16 %v1386
    %v1921 = vunpack.c.h.b16 %v1386
    %v1922 = vunpack.c.l.b16 %v1387
    %v1923 = vunpack.c.h.b16 %v1387
    %v1924 = vunpack.c.l.b16 %v1388
    %v1925 = vunpack.c.h.b16 %v1388
    %v1926 = vunpack.c.l.b16 %v1389
    %v1927 = vunpack.c.h.b16 %v1389
    %v1928 = vunpack.c.l.b16 %v1390
    %v1929 = vunpack.c.h.b16 %v1390
    %v1930 = vunpack.c.l.b16 %v1391
    %v1931 = vunpack.c.h.b16 %v1391
    %v1932 = vunpack.c.l.b16 %v1392
    %v1933 = vunpack.c.h.b16 %v1392
    %v1934 = vunpack.c.l.b16 %v1393
    %v1935 = vunpack.c.h.b16 %v1393
    %v1936 = vunpack.c.l.b16 %v1394
    %v1937 = vunpack.c.h.b16 %v1394
    %v1938 = vunpack.c.l.b16 %v1395
    %v1939 = vunpack.c.h.b16 %v1395
    %v1940 = vunpack.c.l.b16 %v1396
    %v1941 = vunpack.c.h.b16 %v1396
    %v1942 = vunpack.c.l.b16 %v1397
    %v1943 = vunpack.c.h.b16 %v1397
    %v1944 = vunpack.c.l.b16 %v1398
    %v1945 = vunpack.c.h.b16 %v1398
    %v1946 = vunpack.c.l.b16 %v1399
    %v1947 = vunpack.c.h.b16 %v1399
    %v1948 = vunpack.c.l.b16 %v1400
    %v1949 = vunpack.c.h.b16 %v1400
    %v1950 = vunpack.c.l.b16 %v1401
    %v1951 = vunpack.c.h.b16 %v1401
    %v1952 = vunpack.c.l.b16 %v1402
    %v1953 = vunpack.c.h.b16 %v1402
    %v1954 = vunpack.c.l.b16 %v1403
    %v1955 = vunpack.c.h.b16 %v1403
    %v1956 = vunpack.c.l.b16 %v1404
    %v1957 = vunpack.c.h.b16 %v1404
    %v1958 = vunpack.c.l.b16 %v1405
    %v1959 = vunpack.c.h.b16 %v1405
    %v1960 = vunpack.c.l.b16 %v1406
    %v1961 = vunpack.c.h.b16 %v1406
    %v1962 = vunpack.c.l.b16 %v1407
    %v1963 = vunpack.c.h.b16 %v1407
    %v1964 = vunpack.c.l.b16 %v1408
    %v1965 = vunpack.c.h.b16 %v1408
    %v1966 = vunpack.c.l.b16 %v1409
    %v1967 = vunpack.c.h.b16 %v1409
    %v1968 = vunpack.c.l.b16 %v1410
    %v1969 = vunpack.c.h.b16 %v1410
    %v1970 = vunpack.c.l.b16 %v1411
    %v1971 = vunpack.c.h.b16 %v1411
    %v1972 = vunpack.c.l.b16 %v1412
    %v1973 = vunpack.c.h.b16 %v1412
    %v1974 = vunpack.c.l.b16 %v1413
    %v1975 = vunpack.c.h.b16 %v1413
    %v1976 = vunpack.c.l.b16 %v1414
    %v1977 = vunpack.c.h.b16 %v1414
    %v1978 = vunpack.c.l.b16 %v1415
    %v1979 = vunpack.c.h.b16 %v1415
    %v1980 = vunpack.c.l.b16 %v1416
    %v1981 = vunpack.c.h.b16 %v1416
    %v1982 = vunpack.c.l.b16 %v1417
    %v1983 = vunpack.c.h.b16 %v1417
    %v1984 = vunpack.c.l.b16 %v1418
    %v1985 = vunpack.c.h.b16 %v1418
    %v1986 = vunpack.c.l.b16 %v1419
    %v1987 = vunpack.c.h.b16 %v1419
    %v1988 = vunpack.c.l.b16 %v1420
    %v1989 = vunpack.c.h.b16 %v1420
    %v1990 = vunpack.c.l.b16 %v1421
    %v1991 = vunpack.c.h.b16 %v1421
    %v1992 = vunpack.c.l.b16 %v1422
    %v1993 = vunpack.c.h.b16 %v1422
    %v1994 = vunpack.c.l.b16 %v1423
    %v1995 = vunpack.c.h.b16 %v1423
    %v1996 = vunpack.c.l.b16 %v1424
    %v1997 = vunpack.c.h.b16 %v1424
    %v1998 = vunpack.c.l.b16 %v1425
    %v1999 = vunpack.c.h.b16 %v1425
    %v2000 = vunpack.c.l.b16 %v1426
    %v2001 = vunpack.c.h.b16 %v1426
    %v2002 = vunpack.c.l.b16 %v1427
    %v2003 = vunpack.c.h.b16 %v1427
    %v2004 = vunpack.c.l.b16 %v1428
    %v2005 = vunpack.c.h.b16 %v1428
    %v2006 = vunpack.c.l.b16 %v1429
    %v2007 = vunpack.c.h.b16 %v1429
    %v2008 = vunpack.c.l.b16 %v1430
    %v2009 = vunpack.c.h.b16 %v1430
    %v2010 = vunpack.c.l.b16 %v1431
    %v2011 = vunpack.c.h.b16 %v1431
    %v2012 = vunpack.c.l.b16 %v1432
    %v2013 = vunpack.c.h.b16 %v1432
    %v2014 = vunpack.c.l.b16 %v1433
    %v2015 = vunpack.c.h.b16 %v1433
    %v2016 = vunpack.c.l.b16 %v1434
    %v2017 = vunpack.c.h.b16 %v1434
    %v2018 = vunpack.c.l.b16 %v1435
    %v2019 = vunpack.c.h.b16 %v1435
    %v2020 = vunpack.c.l.b16 %v1436
    %v2021 = vunpack.c.h.b16 %v1436
    %v2022 = vunpack.c.l.b16 %v1437
    %v2023 = vunpack.c.h.b16 %v1437
    %v2024 = vunpack.c.l.b16 %v1438
    %v2025 = vunpack.c.h.b16 %v1438
    %v2026 = vunpack.c.l.b16 %v1439
    %v2027 = vunpack.c.h.b16 %v1439
    %v2028 = vunpack.c.l.b16 %v1440
    %v2029 = vunpack.c.h.b16 %v1440
    %v2030 = vunpack.c.l.b16 %v1441
    %v2031 = vunpack.c.h.b16 %v1441
    %v2032 = vunpack.c.l.b16 %v1442
    %v2033 = vunpack.c.h.b16 %v1442
    %v2034 = vunpack.c.l.b16 %v1443
    %v2035 = vunpack.c.h.b16 %v1443
    %v2036 = vunpack.c.l.b16 %v1444
    %v2037 = vunpack.c.h.b16 %v1444
    %v2038 = vunpack.c.l.b16 %v1445
    %v2039 = vunpack.c.h.b16 %v1445
    %v2040 = vunpack.c.l.b16 %v1446
    %v2041 = vunpack.c.h.b16 %v1446
    %v2042 = vunpack.c.l.b16 %v1447
    %v2043 = vunpack.c.h.b16 %v1447
    %v2044 = vunpack.c.l.b16 %v1448
    %v2045 = vunpack.c.h.b16 %v1448
    %v2046 = vunpack.c.l.b16 %v1449
    %v2047 = vunpack.c.h.b16 %v1449
    %v2048 = vpack.c.b16 %v1668, %v1664
    %v2049 = vpack.c.b16 %v1669, %v1665
    %v2050 = vpack.c.b16 %v1670, %v1666
    %v2051 = vpack.c.b16 %v1671, %v1667
    %v2052 = vpack.c.b16 %v1676, %v1672
    %v2053 = vpack.c.b16 %v1677, %v1673
    %v2054 = vpack.c.b16 %v1678, %v1674
    %v2055 = vpack.c.b16 %v1679, %v1675
    %v2056 = vpack.c.b16 %v1684, %v1680
    %v2057 = vpack.c.b16 %v1685, %v1681
    %v2058 = vpack.c.b16 %v1686, %v1682
    %v2059 = vpack.c.b16 %v1687, %v1683
    %v2060 = vpack.c.b16 %v1692, %v1688
    %v2061 = vpack.c.b16 %v1693, %v1689
    %v2062 = vpack.c.b16 %v1694, %v1690
    %v2063 = vpack.c.b16 %v1695, %v1691
    %v2064 = vpack.c.b16 %v1700, %v1696
    %v2065 = vpack.c.b16 %v1701, %v1697
    %v2066 = vpack.c.b16 %v1702, %v1698
    %v2067 = vpack.c.b16 %v1703, %v1699
    %v2068 = vpack.c.b16 %v1708, %v1704
    %v2069 = vpack.c.b16 %v1709, %v1705
    %v2070 = vpack.c.b16 %v1710, %v1706
    %v2071 = vpack.c.b16 %v1711, %v1707
    %v2072 = vpack.c.b16 %v1716, %v1712
    %v2073 = vpack.c.b16 %v1717, %v1713
    %v2074 = vpack.c.b16 %v1718, %v1714
    %v2075 = vpack.c.b16 %v1719, %v1715
    %v2076 = vpack.c.b16 %v1724, %v1720
    %v2077 = vpack.c.b16 %v1725, %v1721
    %v2078 = vpack.c.b16 %v1726, %v1722
    %v2079 = vpack.c.b16 %v1727, %v1723
    %v2080 = vpack.c.b16 %v1732, %v1728
    %v2081 = vpack.c.b16 %v1733, %v1729
    %v2082 = vpack.c.b16 %v1734, %v1730
    %v2083 = vpack.c.b16 %v1735, %v1731
    %v2084 = vpack.c.b16 %v1740, %v1736
    %v2085 = vpack.c.b16 %v1741, %v1737
    %v2086 = vpack.c.b16 %v1742, %v1738
    %v2087 = vpack.c.b16 %v1743, %v1739
    %v2088 = vpack.c.b16 %v1748, %v1744
    %v2089 = vpack.c.b16 %v1749, %v1745
    %v2090 = vpack.c.b16 %v1750, %v1746
    %v2091 = vpack.c.b16 %v1751, %v1747
    %v2092 = vpack.c.b16 %v1756, %v1752
    %v2093 = vpack.c.b16 %v1757, %v1753
    %v2094 = vpack.c.b16 %v1758, %v1754
    %v2095 = vpack.c.b16 %v1759, %v1755
    %v2096 = vpack.c.b16 %v1764, %v1760
    %v2097 = vpack.c.b16 %v1765, %v1761
    %v2098 = vpack.c.b16 %v1766, %v1762
    %v2099 = vpack.c.b16 %v1767, %v1763
    %v2100 = vpack.c.b16 %v1772, %v1768
    %v2101 = vpack.c.b16 %v1773, %v1769
    %v2102 = vpack.c.b16 %v1774, %v1770
    %v2103 = vpack.c.b16 %v1775, %v1771
    %v2104 = vpack.c.b16 %v1780, %v1776
    %v2105 = vpack.c.b16 %v1781, %v1777
    %v2106 = vpack.c.b16 %v1782, %v1778
    %v2107 = vpack.c.b16 %v1783, %v1779
    %v2108 = vpack.c.b16 %v1788, %v1784
    %v2109 = vpack.c.b16 %v1789, %v1785
    %v2110 = vpack.c.b16 %v1790, %v1786
    %v2111 = vpack.c.b16 %v1791, %v1787
    %v2112 = vpack.c.b16 %v1796, %v1792
    %v2113 = vpack.c.b16 %v1797, %v1793
    %v2114 = vpack.c.b16 %v1798, %v1794
    %v2115 = vpack.c.b16 %v1799, %v1795
    %v2116 = vpack.c.b16 %v1804, %v1800
    %v2117 = vpack.c.b16 %v1805, %v1801
    %v2118 = vpack.c.b16 %v1806, %v1802
    %v2119 = vpack.c.b16 %v1807, %v1803
    %v2120 = vpack.c.b16 %v1812, %v1808
    %v2121 = vpack.c.b16 %v1813, %v1809
    %v2122 = vpack.c.b16 %v1814, %v1810
    %v2123 = vpack.c.b16 %v1815, %v1811
    %v2124 = vpack.c.b16 %v1820, %v1816
    %v2125 = vpack.c.b16 %v1821, %v1817
    %v2126 = vpack.c.b16 %v1822, %v1818
    %v2127 = vpack.c.b16 %v1823, %v1819
    %v2128 = vpack.c.b16 %v1828, %v1824
    %v2129 = vpack.c.b16 %v1829, %v1825
    %v2130 = vpack.c.b16 %v1830, %v1826
    %v2131 = vpack.c.b16 %v1831, %v1827
    %v2132 = vpack.c.b16 %v1836, %v1832
    %v2133 = vpack.c.b16 %v1837, %v1833
    %v2134 = vpack.c.b16 %v1838, %v1834
    %v2135 = vpack.c.b16 %v1839, %v1835
    %v2136 = vpack.c.b16 %v1844, %v1840
    %v2137 = vpack.c.b16 %v1845, %v1841
    %v2138 = vpack.c.b16 %v1846, %v1842
    %v2139 = vpack.c.b16 %v1847, %v1843
    %v2140 = vpack.c.b16 %v1852, %v1848
    %v2141 = vpack.c.b16 %v1853, %v1849
    %v2142 = vpack.c.b16 %v1854, %v1850
    %v2143 = vpack.c.b16 %v1855, %v1851
    %v2144 = vpack.c.b16 %v1860, %v1856
    %v2145 = vpack.c.b16 %v1861, %v1857
    %v2146 = vpack.c.b16 %v1862, %v1858
    %v2147 = vpack.c.b16 %v1863, %v1859
    %v2148 = vpack.c.b16 %v1868, %v1864
    %v2149 = vpack.c.b16 %v1869, %v1865
    %v2150 = vpack.c.b16 %v1870, %v1866
    %v2151 = vpack.c.b16 %v1871, %v1867
    %v2152 = vpack.c.b16 %v1876, %v1872
    %v2153 = vpack.c.b16 %v1877, %v1873
    %v2154 = vpack.c.b16 %v1878, %v1874
    %v2155 = vpack.c.b16 %v1879, %v1875
    %v2156 = vpack.c.b16 %v1884, %v1880
    %v2157 = vpack.c.b16 %v1885, %v1881
    %v2158 = vpack.c.b16 %v1886, %v1882
    %v2159 = vpack.c.b16 %v1887, %v1883
    %v2160 = vpack.c.b16 %v1892, %v1888
    %v2161 = vpack.c.b16 %v1893, %v1889
    %v2162 = vpack.c.b16 %v1894, %v1890
    %v2163 = vpack.c.b16 %v1895, %v1891
    %v2164 = vpack.c.b16 %v1900, %v1896
    %v2165 = vpack.c.b16 %v1901, %v1897
    %v2166 = vpack.c.b16 %v1902, %v1898
    %v2167 = vpack.c.b16 %v1903, %v1899
    %v2168 = vpack.c.b16 %v1908, %v1904
    %v2169 = vpack.c.b16 %v1909, %v1905
    %v2170 = vpack.c.b16 %v1910, %v1906
    %v2171 = vpack.c.b16 %v1911, %v1907
    %v2172 = vpack.c.b16 %v1916, %v1912
    %v2173 = vpack.c.b16 %v1917, %v1913
    %v2174 = vpack.c.b16 %v1918, %v1914
    %v2175 = vpack.c.b16 %v1919, %v1915
    %v2176 = vpack.c.b16 %v1924, %v1920
    %v2177 = vpack.c.b16 %v1925, %v1921
    %v2178 = vpack.c.b16 %v1926, %v1922
    %v2179 = vpack.c.b16 %v1927, %v1923
    %v2180 = vpack.c.b16 %v1932, %v1928
    %v2181 = vpack.c.b16 %v1933, %v1929
    %v2182 = vpack.c.b16 %v1934, %v1930
    %v2183 = vpack.c.b16 %v1935, %v1931
    %v2184 = vpack.c.b16 %v1940, %v1936
    %v2185 = vpack.c.b16 %v1941, %v1937
    %v2186 = vpack.c.b16 %v1942, %v1938
    %v2187 = vpack.c.b16 %v1943, %v1939
    %v2188 = vpack.c.b16 %v1948, %v1944
    %v2189 = vpack.c.b16 %v1949, %v1945
    %v2190 = vpack.c.b16 %v1950, %v1946
    %v2191 = vpack.c.b16 %v1951, %v1947
    %v2192 = vpack.c.b16 %v1956, %v1952
    %v2193 = vpack.c.b16 %v1957, %v1953
    %v2194 = vpack.c.b16 %v1958, %v1954
    %v2195 = vpack.c.b16 %v1959, %v1955
    %v2196 = vpack.c.b16 %v1964, %v1960
    %v2197 = vpack.c.b16 %v1965, %v1961
    %v2198 = vpack.c.b16 %v1966, %v1962
    %v2199 = vpack.c.b16 %v1967, %v1963
    %v2200 = vpack.c.b16 %v1972, %v1968
    %v2201 = vpack.c.b16 %v1973, %v1969
    %v2202 = vpack.c.b16 %v1974, %v1970
    %v2203 = vpack.c.b16 %v1975, %v1971
    %v2204 = vpack.c.b16 %v1980, %v1976
    %v2205 = vpack.c.b16 %v1981, %v1977
    %v2206 = vpack.c.b16 %v1982, %v1978
    %v2207 = vpack.c.b16 %v1983, %v1979
    %v2208 = vpack.c.b16 %v1988, %v1984
    %v2209 = vpack.c.b16 %v1989, %v1985
    %v2210 = vpack.c.b16 %v1990, %v1986
    %v2211 = vpack.c.b16 %v1991, %v1987
    %v2212 = vpack.c.b16 %v1996, %v1992
    %v2213 = vpack.c.b16 %v1997, %v1993
    %v2214 = vpack.c.b16 %v1998, %v1994
    %v2215 = vpack.c.b16 %v1999, %v1995
    %v2216 = vpack.c.b16 %v2004, %v2000
    %v2217 = vpack.c.b16 %v2005, %v2001
    %v2218 = vpack.c.b16 %v2006, %v2002
    %v2219 = vpack.c.b16 %v2007, %v2003
    %v2220 = vpack.c.b16 %v2012, %v2008
    %v2221 = vpack.c.b16 %v2013, %v2009
    %v2222 = vpack.c.b16 %v2014, %v2010
    %v2223 = vpack.c.b16 %v2015, %v2011
    %v2224 = vpack.c.b16 %v2020, %v2016
    %v2225 = vpack.c.b16 %v2021, %v2017
    %v2226 = vpack.c.b16 %v2022, %v2018
    %v2227 = vpack.c.b16 %v2023, %v2019
    %v2228 = vpack.c.b16 %v2028, %v2024
    %v2229 = vpack.c.b16 %v2029, %v2025
    %v2230 = vpack.c.b16 %v2030, %v2026
    %v2231 = vpack.c.b16 %v2031, %v2027
    %v2232 = vpack.c.b16 %v2036, %v2032
    %v2233 = vpack.c.b16 %v2037, %v2033
    %v2234 = vpack.c.b16 %v2038, %v2034
    %v2235 = vpack.c.b16 %v2039, %v2035
    %v2236 = vpack.c.b16 %v2044, %v2040
    %v2237 = vpack.c.b16 %v2045, %v2041
    %v2238 = vpack.c.b16 %v2046, %v2042
    %v2239 = vpack.c.b16 %v2047, %v2043
    %2432 = vmatprep.subr.bf16.mxu0 %v2077
    %2433 = vmatpush1.bf16.msra.mxu0 %v2076
    %2434 = vmatprep.subr.bf16.mxu0 %v2073
    %2435 = vmatpush1.bf16.msra.mxu0 %v2072
    %2436 = vmatprep.subr.bf16.mxu0 %v2069
    %2437 = vmatpush1.bf16.msra.mxu0 %v2068
    %2438 = vmatprep.subr.bf16.mxu0 %v2065
    %2439 = vmatpush1.bf16.msra.mxu0 %v2064
    %2440 = vmatprep.subr.bf16.mxu0 %v2061
    %2441 = vmatpush1.bf16.msra.mxu0 %v2060
    %2442 = vmatprep.subr.bf16.mxu0 %v2057
    %2443 = vmatpush1.bf16.msra.mxu0 %v2056
    %2444 = vmatprep.subr.bf16.mxu0 %v2053
    %2445 = vmatpush1.bf16.msra.mxu0 %v2052
    %2446 = vmatprep.subr.bf16.mxu0 %v2049
    %2447 = vmatpush1.bf16.msra.mxu0 %v2048
    %2448 = vmatprep.subr.bf16.mxu0 %v2109
    %2449 = vmatpush2.bf16.msra.mxu0 %v2108
    %2450 = vmatprep.subr.bf16.mxu0 %v2105
    %2451 = vmatpush2.bf16.msra.mxu0 %v2104
    %2452 = vmatprep.subr.bf16.mxu0 %v2101
    %2453 = vmatpush2.bf16.msra.mxu0 %v2100
    %2454 = vmatprep.subr.bf16.mxu0 %v2097
    %2455 = vmatpush2.bf16.msra.mxu0 %v2096
    %2456 = vmatprep.subr.bf16.mxu0 %v2093
    %2457 = vmatpush2.bf16.msra.mxu0 %v2092
    %2458 = vmatprep.subr.bf16.mxu0 %v2089
    %2459 = vmatpush2.bf16.msra.mxu0 %v2088
    %2460 = vmatprep.subr.bf16.mxu0 %v2085
    %2461 = vmatpush2.bf16.msra.mxu0 %v2084
    %2462 = vmatprep.subr.bf16.mxu0 %v2081
    %2463 = vmatpush2.bf16.msra.mxu0 %v2080
    %2464 = vmatprep.mubr.bf16.mxu0 %v1253
    %2465 = vmatmul.mubr.bf16.gmra.mxu0 %v1252
    %v2466 = vpop.f32.mrf.mxu0
    %v2467 = vadd.f32 %v1455, %v2466
    %v2468 = vpop.f32.mrf.mxu0
    %v2469 = vadd.f32 %v1459, %v2468
    %v2470 = vpop.f32.mrf.mxu0
    %v2471 = vpop.f32.mrf.mxu0
    %2472 = vdwg.mxu0
    %2473 = vmatprep.subr.bf16.mxu0 %v2141
    %2474 = vmatpush1.bf16.msra.mxu0 %v2140
    %2475 = vmatprep.subr.bf16.mxu0 %v2137
    %2476 = vmatpush1.bf16.msra.mxu0 %v2136
    %2477 = vmatprep.subr.bf16.mxu0 %v2133
    %2478 = vmatpush1.bf16.msra.mxu0 %v2132
    %2479 = vmatprep.subr.bf16.mxu0 %v2129
    %2480 = vmatpush1.bf16.msra.mxu0 %v2128
    %2481 = vmatprep.subr.bf16.mxu0 %v2125
    %2482 = vmatpush1.bf16.msra.mxu0 %v2124
    %2483 = vmatprep.subr.bf16.mxu0 %v2121
    %2484 = vmatpush1.bf16.msra.mxu0 %v2120
    %2485 = vmatprep.subr.bf16.mxu0 %v2117
    %2486 = vmatpush1.bf16.msra.mxu0 %v2116
    %2487 = vmatprep.subr.bf16.mxu0 %v2113
    %2488 = vmatpush1.bf16.msra.mxu0 %v2112
    %2489 = vmatprep.subr.bf16.mxu0 %v2173
    %2490 = vmatpush2.bf16.msra.mxu0 %v2172
    %2491 = vmatprep.subr.bf16.mxu0 %v2169
    %2492 = vmatpush2.bf16.msra.mxu0 %v2168
    %2493 = vmatprep.subr.bf16.mxu0 %v2165
    %2494 = vmatpush2.bf16.msra.mxu0 %v2164
    %2495 = vmatprep.subr.bf16.mxu0 %v2161
    %2496 = vmatpush2.bf16.msra.mxu0 %v2160
    %2497 = vmatprep.subr.bf16.mxu0 %v2157
    %2498 = vmatpush2.bf16.msra.mxu0 %v2156
    %2499 = vmatprep.subr.bf16.mxu0 %v2153
    %2500 = vmatpush2.bf16.msra.mxu0 %v2152
    %2501 = vmatprep.subr.bf16.mxu0 %v2149
    %2502 = vmatpush2.bf16.msra.mxu0 %v2148
    %2503 = vmatprep.subr.bf16.mxu0 %v2145
    %2504 = vmatpush2.bf16.msra.mxu0 %v2144
    %2505 = vmatprep.mubr.bf16.mxu0 %v1255
    %2506 = vmatmul.mubr.bf16.gmra.mxu0 %v1254
    %v2507 = vpop.f32.mrf.mxu0
    %v2508 = vadd.f32 %v2467, %v2507
    %v2509 = vpop.f32.mrf.mxu0
    %v2510 = vadd.f32 %v2469, %v2509
    %v2511 = vpop.f32.mrf.mxu0
    %v2512 = vpop.f32.mrf.mxu0
    %2513 = vdwg.mxu0
    %2514 = vmatprep.subr.bf16.mxu0 %v2205
    %2515 = vmatpush1.bf16.msra.mxu0 %v2204
    %2516 = vmatprep.subr.bf16.mxu0 %v2201
    %2517 = vmatpush1.bf16.msra.mxu0 %v2200
    %2518 = vmatprep.subr.bf16.mxu0 %v2197
    %2519 = vmatpush1.bf16.msra.mxu0 %v2196
    %2520 = vmatprep.subr.bf16.mxu0 %v2193
    %2521 = vmatpush1.bf16.msra.mxu0 %v2192
    %2522 = vmatprep.subr.bf16.mxu0 %v2189
    %2523 = vmatpush1.bf16.msra.mxu0 %v2188
    %2524 = vmatprep.subr.bf16.mxu0 %v2185
    %2525 = vmatpush1.bf16.msra.mxu0 %v2184
    %2526 = vmatprep.subr.bf16.mxu0 %v2181
    %2527 = vmatpush1.bf16.msra.mxu0 %v2180
    %2528 = vmatprep.subr.bf16.mxu0 %v2177
    %2529 = vmatpush1.bf16.msra.mxu0 %v2176
    %2530 = vmatprep.subr.bf16.mxu0 %v2237
    %2531 = vmatpush2.bf16.msra.mxu0 %v2236
    %2532 = vmatprep.subr.bf16.mxu0 %v2233
    %2533 = vmatpush2.bf16.msra.mxu0 %v2232
    %2534 = vmatprep.subr.bf16.mxu0 %v2229
    %2535 = vmatpush2.bf16.msra.mxu0 %v2228
    %2536 = vmatprep.subr.bf16.mxu0 %v2225
    %2537 = vmatpush2.bf16.msra.mxu0 %v2224
    %2538 = vmatprep.subr.bf16.mxu0 %v2221
    %2539 = vmatpush2.bf16.msra.mxu0 %v2220
    %2540 = vmatprep.subr.bf16.mxu0 %v2217
    %2541 = vmatpush2.bf16.msra.mxu0 %v2216
    %2542 = vmatprep.subr.bf16.mxu0 %v2213
    %2543 = vmatpush2.bf16.msra.mxu0 %v2212
    %2544 = vmatprep.subr.bf16.mxu0 %v2209
    %2545 = vmatpush2.bf16.msra.mxu0 %v2208
    %2546 = vmatprep.mubr.bf16.mxu0 %v1257
    %2547 = vmatmul.mubr.bf16.gmra.mxu0 %v1256
    %v2548 = vpop.f32.mrf.mxu0
    %v2549 = vadd.f32 %v2508, %v2548
    %v2550 = vpop.f32.mrf.mxu0
    %v2551 = vadd.f32 %v2510, %v2550
    %v2552 = vpop.f32.mrf.mxu0
    %v2553 = vpop.f32.mrf.mxu0
    %2554 = vdwg.mxu0
    %2555 = vmatprep.subr.bf16.mxu0 %v2079
    %2556 = vmatpush1.bf16.msra.mxu0 %v2078
    %2557 = vmatprep.subr.bf16.mxu0 %v2075
    %2558 = vmatpush1.bf16.msra.mxu0 %v2074
    %2559 = vmatprep.subr.bf16.mxu0 %v2071
    %2560 = vmatpush1.bf16.msra.mxu0 %v2070
    %2561 = vmatprep.subr.bf16.mxu0 %v2067
    %2562 = vmatpush1.bf16.msra.mxu0 %v2066
    %2563 = vmatprep.subr.bf16.mxu0 %v2063
    %2564 = vmatpush1.bf16.msra.mxu0 %v2062
    %2565 = vmatprep.subr.bf16.mxu0 %v2059
    %2566 = vmatpush1.bf16.msra.mxu0 %v2058
    %2567 = vmatprep.subr.bf16.mxu0 %v2055
    %2568 = vmatpush1.bf16.msra.mxu0 %v2054
    %2569 = vmatprep.subr.bf16.mxu0 %v2051
    %2570 = vmatpush1.bf16.msra.mxu0 %v2050
    %2571 = vmatprep.subr.bf16.mxu0 %v2111
    %2572 = vmatpush2.bf16.msra.mxu0 %v2110
    %2573 = vmatprep.subr.bf16.mxu0 %v2107
    %2574 = vmatpush2.bf16.msra.mxu0 %v2106
    %2575 = vmatprep.subr.bf16.mxu0 %v2103
    %2576 = vmatpush2.bf16.msra.mxu0 %v2102
    %2577 = vmatprep.subr.bf16.mxu0 %v2099
    %2578 = vmatpush2.bf16.msra.mxu0 %v2098
    %2579 = vmatprep.subr.bf16.mxu0 %v2095
    %2580 = vmatpush2.bf16.msra.mxu0 %v2094
    %2581 = vmatprep.subr.bf16.mxu0 %v2091
    %2582 = vmatpush2.bf16.msra.mxu0 %v2090
    %2583 = vmatprep.subr.bf16.mxu0 %v2087
    %2584 = vmatpush2.bf16.msra.mxu0 %v2086
    %2585 = vmatprep.subr.bf16.mxu0 %v2083
    %2586 = vmatpush2.bf16.msra.mxu0 %v2082
    %2587 = vmatprep.mubr.bf16.mxu0 %v1253
    %2588 = vmatmul.mubr.bf16.gmra.mxu0 %v1252
    %v2589 = vpop.f32.mrf.mxu0
    %v2590 = vadd.f32 %v1463, %v2589
    %v2591 = vpop.f32.mrf.mxu0
    %v2592 = vadd.f32 %v1467, %v2591
    %v2593 = vpop.f32.mrf.mxu0
    %v2594 = vpop.f32.mrf.mxu0
    %2595 = vdwg.mxu0
    %2596 = vmatprep.subr.bf16.mxu0 %v2143
    %2597 = vmatpush1.bf16.msra.mxu0 %v2142
    %2598 = vmatprep.subr.bf16.mxu0 %v2139
    %2599 = vmatpush1.bf16.msra.mxu0 %v2138
    %2600 = vmatprep.subr.bf16.mxu0 %v2135
    %2601 = vmatpush1.bf16.msra.mxu0 %v2134
    %2602 = vmatprep.subr.bf16.mxu0 %v2131
    %2603 = vmatpush1.bf16.msra.mxu0 %v2130
    %2604 = vmatprep.subr.bf16.mxu0 %v2127
    %2605 = vmatpush1.bf16.msra.mxu0 %v2126
    %2606 = vmatprep.subr.bf16.mxu0 %v2123
    %2607 = vmatpush1.bf16.msra.mxu0 %v2122
    %2608 = vmatprep.subr.bf16.mxu0 %v2119
    %2609 = vmatpush1.bf16.msra.mxu0 %v2118
    %2610 = vmatprep.subr.bf16.mxu0 %v2115
    %2611 = vmatpush1.bf16.msra.mxu0 %v2114
    %2612 = vmatprep.subr.bf16.mxu0 %v2175
    %2613 = vmatpush2.bf16.msra.mxu0 %v2174
    %2614 = vmatprep.subr.bf16.mxu0 %v2171
    %2615 = vmatpush2.bf16.msra.mxu0 %v2170
    %2616 = vmatprep.subr.bf16.mxu0 %v2167
    %2617 = vmatpush2.bf16.msra.mxu0 %v2166
    %2618 = vmatprep.subr.bf16.mxu0 %v2163
    %2619 = vmatpush2.bf16.msra.mxu0 %v2162
    %2620 = vmatprep.subr.bf16.mxu0 %v2159
    %2621 = vmatpush2.bf16.msra.mxu0 %v2158
    %2622 = vmatprep.subr.bf16.mxu0 %v2155
    %2623 = vmatpush2.bf16.msra.mxu0 %v2154
    %2624 = vmatprep.subr.bf16.mxu0 %v2151
    %2625 = vmatpush2.bf16.msra.mxu0 %v2150
    %2626 = vmatprep.subr.bf16.mxu0 %v2147
    %2627 = vmatpush2.bf16.msra.mxu0 %v2146
    %2628 = vmatprep.mubr.bf16.mxu0 %v1255
    %2629 = vmatmul.mubr.bf16.gmra.mxu0 %v1254
    %v2630 = vpop.f32.mrf.mxu0
    %v2631 = vadd.f32 %v2590, %v2630
    %v2632 = vpop.f32.mrf.mxu0
    %v2633 = vadd.f32 %v2592, %v2632
    %v2634 = vpop.f32.mrf.mxu0
    %v2635 = vpop.f32.mrf.mxu0
    %2636 = vdwg.mxu0
    %2637 = vmatprep.subr.bf16.mxu0 %v2207
    %2638 = vmatpush1.bf16.msra.mxu0 %v2206
    %2639 = vmatprep.subr.bf16.mxu0 %v2203
    %2640 = vmatpush1.bf16.msra.mxu0 %v2202
    %2641 = vmatprep.subr.bf16.mxu0 %v2199
    %2642 = vmatpush1.bf16.msra.mxu0 %v2198
    %2643 = vmatprep.subr.bf16.mxu0 %v2195
    %2644 = vmatpush1.bf16.msra.mxu0 %v2194
    %2645 = vmatprep.subr.bf16.mxu0 %v2191
    %2646 = vmatpush1.bf16.msra.mxu0 %v2190
    %2647 = vmatprep.subr.bf16.mxu0 %v2187
    %2648 = vmatpush1.bf16.msra.mxu0 %v2186
    %2649 = vmatprep.subr.bf16.mxu0 %v2183
    %2650 = vmatpush1.bf16.msra.mxu0 %v2182
    %2651 = vmatprep.subr.bf16.mxu0 %v2179
    %2652 = vmatpush1.bf16.msra.mxu0 %v2178
    %2653 = vmatprep.subr.bf16.mxu0 %v2239
    %2654 = vmatpush2.bf16.msra.mxu0 %v2238
    %2655 = vmatprep.subr.bf16.mxu0 %v2235
    %2656 = vmatpush2.bf16.msra.mxu0 %v2234
    %2657 = vmatprep.subr.bf16.mxu0 %v2231
    %2658 = vmatpush2.bf16.msra.mxu0 %v2230
    %2659 = vmatprep.subr.bf16.mxu0 %v2227
    %2660 = vmatpush2.bf16.msra.mxu0 %v2226
    %2661 = vmatprep.subr.bf16.mxu0 %v2223
    %2662 = vmatpush2.bf16.msra.mxu0 %v2222
    %2663 = vmatprep.subr.bf16.mxu0 %v2219
    %2664 = vmatpush2.bf16.msra.mxu0 %v2218
    %2665 = vmatprep.subr.bf16.mxu0 %v2215
    %2666 = vmatpush2.bf16.msra.mxu0 %v2214
    %2667 = vmatprep.subr.bf16.mxu0 %v2211
    %2668 = vmatpush2.bf16.msra.mxu0 %v2210
    %2669 = vmatprep.mubr.bf16.mxu0 %v1257
    %2670 = vmatmul.mubr.bf16.gmra.mxu0 %v1256
    %v2671 = vpop.f32.mrf.mxu0
    %v2672 = vadd.f32 %v2631, %v2671
    %v2673 = vpop.f32.mrf.mxu0
    %v2674 = vadd.f32 %v2633, %v2673
    %v2675 = vpop.f32.mrf.mxu0
    %v2676 = vpop.f32.mrf.mxu0
    %2677 = vdwg.mxu0
    %v2678 = vmul.f32 %v2549, %v2549
    %v2679 = vmul.f32 %v2551, %v2551
    %v2680 = vmul.f32 %v2672, %v2672
    %v2681 = vmul.f32 %v2674, %v2674
    %v2682 = vmul.f32 %v2549, %v2678
    %v2683 = vmul.f32 %v2551, %v2679
    %v2684 = vmul.f32 %v2672, %v2680
    %v2685 = vmul.f32 %v2674, %v2681
    %v2686 = vmul.f32 %v2682, 0.044715
    %v2687 = vmul.f32 %v2683, 0.044715
    %v2688 = vmul.f32 %v2684, 0.044715
    %v2689 = vmul.f32 %v2685, 0.044715
    %v2690 = vadd.f32 %v2549, %v2686
    %v2691 = vadd.f32 %v2551, %v2687
    %v2692 = vadd.f32 %v2672, %v2688
    %v2693 = vadd.f32 %v2674, %v2689
    %v2694 = vmul.f32 %v2690, 0.7978846
    %v2695 = vmul.f32 %v2691, 0.7978846
    %v2696 = vmul.f32 %v2692, 0.7978846
    %v2697 = vmul.f32 %v2693, 0.7978846
    %v2698 = vtanh.pop %v2694
    %v2699 = vtanh.pop %v2695
    %v2700 = vtanh.pop %v2696
    %v2701 = vtanh.pop %v2697
    %v2702 = vadd.f32 %v2698, 1.0
    %v2703 = vadd.f32 %v2699, 1.0
    %v2704 = vadd.f32 %v2700, 1.0
    %v2705 = vadd.f32 %v2701, 1.0
    %v2706 = vmul.f32 %v2702, 0.5
    %v2707 = vmul.f32 %v2703, 0.5
    %v2708 = vmul.f32 %v2704, 0.5
    %v2709 = vmul.f32 %v2705, 0.5
    %v2710 = vmul.f32 %v2549, %v2706
    %v2711 = vmul.f32 %v2551, %v2707
    %v2712 = vmul.f32 %v2672, %v2708
    %v2713 = vmul.f32 %v2674, %v2709
    %v2714 = vpack.c.bf16 %v2710, %v2710
    %v2715 = vpack.c.bf16 %v2711, %v2711
    %v2716 = vpack.c.bf16 %v2712, %v2712
    %v2717 = vpack.c.bf16 %v2713, %v2713
    %v2718 = vld [vmem:[#allocation8] sm:$0xf]
    %v2719 = vld [vmem:[#allocation8 + $0x4] sm:$0xf]
    %v2720 = vld [vmem:[#allocation8 + $0x8] sm:$0xf]
    %v2721 = vld [vmem:[#allocation8 + $0xc] sm:$0xf]
    %v2722 = vld [vmem:[#allocation8 + $0x10] sm:$0xf]
    %v2723 = vld [vmem:[#allocation8 + $0x14] sm:$0xf]
    %v2724 = vld [vmem:[#allocation8 + $0x18] sm:$0xf]
    %v2725 = vld [vmem:[#allocation8 + $0x1c] sm:$0xf]
    %v2726 = vld [vmem:[#allocation8 + $0x20] sm:$0xf]
    %v2727 = vld [vmem:[#allocation8 + $0x24] sm:$0xf]
    %v2728 = vld [vmem:[#allocation8 + $0x28] sm:$0xf]
    %v2729 = vld [vmem:[#allocation8 + $0x2c] sm:$0xf]
    %v2730 = vld [vmem:[#allocation8 + $0x30] sm:$0xf]
    %v2731 = vld [vmem:[#allocation8 + $0x34] sm:$0xf]
    %v2732 = vld [vmem:[#allocation8 + $0x38] sm:$0xf]
    %v2733 = vld [vmem:[#allocation8 + $0x3c] sm:$0xf]
    %v2734 = vld [vmem:[#allocation8 + $0x40] sm:$0xf]
    %v2735 = vld [vmem:[#allocation8 + $0x44] sm:$0xf]
    %v2736 = vld [vmem:[#allocation8 + $0x48] sm:$0xf]
    %v2737 = vld [vmem:[#allocation8 + $0x4c] sm:$0xf]
    %v2738 = vld [vmem:[#allocation8 + $0x50] sm:$0xf]
    %v2739 = vld [vmem:[#allocation8 + $0x54] sm:$0xf]
    %v2740 = vld [vmem:[#allocation8 + $0x58] sm:$0xf]
    %v2741 = vld [vmem:[#allocation8 + $0x5c] sm:$0xf]
    %v2742 = vld [vmem:[#allocation8 + $0x60] sm:$0xf]
    %v2743 = vld [vmem:[#allocation8 + $0x64] sm:$0xf]
    %v2744 = vld [vmem:[#allocation8 + $0x68] sm:$0xf]
    %v2745 = vld [vmem:[#allocation8 + $0x6c] sm:$0xf]
    %v2746 = vld [vmem:[#allocation8 + $0x70] sm:$0xf]
    %v2747 = vld [vmem:[#allocation8 + $0x74] sm:$0xf]
    %v2748 = vld [vmem:[#allocation8 + $0x78] sm:$0xf]
    %v2749 = vld [vmem:[#allocation8 + $0x7c] sm:$0xf]
    %v2750 = vld [vmem:[#allocation8 + $0x80] sm:$0xf]
    %v2751 = vld [vmem:[#allocation8 + $0x84] sm:$0xf]
    %v2752 = vld [vmem:[#allocation8 + $0x88] sm:$0xf]
    %v2753 = vld [vmem:[#allocation8 + $0x8c] sm:$0xf]
    %v2754 = vld [vmem:[#allocation8 + $0x90] sm:$0xf]
    %v2755 = vld [vmem:[#allocation8 + $0x94] sm:$0xf]
    %v2756 = vld [vmem:[#allocation8 + $0x98] sm:$0xf]
    %v2757 = vld [vmem:[#allocation8 + $0x9c] sm:$0xf]
    %v2758 = vld [vmem:[#allocation8 + $0xa0] sm:$0xf]
    %v2759 = vld [vmem:[#allocation8 + $0xa4] sm:$0xf]
    %v2760 = vld [vmem:[#allocation8 + $0xa8] sm:$0xf]
    %v2761 = vld [vmem:[#allocation8 + $0xac] sm:$0xf]
    %v2762 = vld [vmem:[#allocation8 + $0xb0] sm:$0xf]
    %v2763 = vld [vmem:[#allocation8 + $0xb4] sm:$0xf]
    %v2764 = vld [vmem:[#allocation8 + $0xb8] sm:$0xf]
    %v2765 = vld [vmem:[#allocation8 + $0xbc] sm:$0xf]
    %v2766 = vld [vmem:[#allocation8 + $0xc0] sm:$0xf]
    %v2767 = vld [vmem:[#allocation8 + $0xc4] sm:$0xf]
    %v2768 = vld [vmem:[#allocation8 + $0xc8] sm:$0xf]
    %v2769 = vld [vmem:[#allocation8 + $0xcc] sm:$0xf]
    %v2770 = vld [vmem:[#allocation8 + $0xd0] sm:$0xf]
    %v2771 = vld [vmem:[#allocation8 + $0xd4] sm:$0xf]
    %v2772 = vld [vmem:[#allocation8 + $0xd8] sm:$0xf]
    %v2773 = vld [vmem:[#allocation8 + $0xdc] sm:$0xf]
    %v2774 = vld [vmem:[#allocation8 + $0xe0] sm:$0xf]
    %v2775 = vld [vmem:[#allocation8 + $0xe4] sm:$0xf]
    %v2776 = vld [vmem:[#allocation8 + $0xe8] sm:$0xf]
    %v2777 = vld [vmem:[#allocation8 + $0xec] sm:$0xf]
    %v2778 = vld [vmem:[#allocation8 + $0xf0] sm:$0xf]
    %v2779 = vld [vmem:[#allocation8 + $0xf4] sm:$0xf]
    %v2780 = vld [vmem:[#allocation8 + $0xf8] sm:$0xf]
    %v2781 = vld [vmem:[#allocation8 + $0xfc] sm:$0xf]
    %v2782 = vld [vmem:[%s5] sm:$0x1]
    %v2784 = vlaneseq
    %v2785 = vshrl.u32 %v2784, 7
    %v2786 = vsub.s32 0, %v2785
    %v2787 = vrot.slane %v2782, %v2786
    %v2853 = vunpack.c.l.b16 %v2718
    %v2854 = vunpack.c.l.b16 %v2719
    %v2855 = vunpack.c.l.b16 %v2720
    %v2856 = vunpack.c.l.b16 %v2721
    %v2857 = vunpack.c.l.b16 %v2722
    %v2858 = vunpack.c.l.b16 %v2723
    %v2859 = vunpack.c.l.b16 %v2724
    %v2860 = vunpack.c.l.b16 %v2725
    %v2861 = vunpack.c.l.b16 %v2726
    %v2862 = vunpack.c.l.b16 %v2727
    %v2863 = vunpack.c.l.b16 %v2728
    %v2864 = vunpack.c.l.b16 %v2729
    %v2865 = vunpack.c.l.b16 %v2730
    %v2866 = vunpack.c.l.b16 %v2731
    %v2867 = vunpack.c.l.b16 %v2732
    %v2868 = vunpack.c.l.b16 %v2733
    %v2869 = vunpack.c.l.b16 %v2734
    %v2870 = vunpack.c.l.b16 %v2735
    %v2871 = vunpack.c.l.b16 %v2736
    %v2872 = vunpack.c.l.b16 %v2737
    %v2873 = vunpack.c.l.b16 %v2738
    %v2874 = vunpack.c.l.b16 %v2739
    %v2875 = vunpack.c.l.b16 %v2740
    %v2876 = vunpack.c.l.b16 %v2741
    %v2877 = vunpack.c.l.b16 %v2742
    %v2878 = vunpack.c.l.b16 %v2743
    %v2879 = vunpack.c.l.b16 %v2744
    %v2880 = vunpack.c.l.b16 %v2745
    %v2881 = vunpack.c.l.b16 %v2746
    %v2882 = vunpack.c.l.b16 %v2747
    %v2883 = vunpack.c.l.b16 %v2748
    %v2884 = vunpack.c.l.b16 %v2749
    %v2885 = vunpack.c.l.b16 %v2750
    %v2886 = vunpack.c.l.b16 %v2751
    %v2887 = vunpack.c.l.b16 %v2752
    %v2888 = vunpack.c.l.b16 %v2753
    %v2889 = vunpack.c.l.b16 %v2754
    %v2890 = vunpack.c.l.b16 %v2755
    %v2891 = vunpack.c.l.b16 %v2756
    %v2892 = vunpack.c.l.b16 %v2757
    %v2893 = vunpack.c.l.b16 %v2758
    %v2894 = vunpack.c.l.b16 %v2759
    %v2895 = vunpack.c.l.b16 %v2760
    %v2896 = vunpack.c.l.b16 %v2761
    %v2897 = vunpack.c.l.b16 %v2762
    %v2898 = vunpack.c.l.b16 %v2763
    %v2899 = vunpack.c.l.b16 %v2764
    %v2900 = vunpack.c.l.b16 %v2765
    %v2901 = vunpack.c.l.b16 %v2766
    %v2902 = vunpack.c.l.b16 %v2767
    %v2903 = vunpack.c.l.b16 %v2768
    %v2904 = vunpack.c.l.b16 %v2769
    %v2905 = vunpack.c.l.b16 %v2770
    %v2906 = vunpack.c.l.b16 %v2771
    %v2907 = vunpack.c.l.b16 %v2772
    %v2908 = vunpack.c.l.b16 %v2773
    %v2909 = vunpack.c.l.b16 %v2774
    %v2910 = vunpack.c.l.b16 %v2775
    %v2911 = vunpack.c.l.b16 %v2776
    %v2912 = vunpack.c.l.b16 %v2777
    %v2913 = vunpack.c.l.b16 %v2778
    %v2914 = vunpack.c.l.b16 %v2779
    %v2915 = vunpack.c.l.b16 %v2780
    %v2916 = vunpack.c.l.b16 %v2781
    %v2917 = vpack.c.b16 %v2854, %v2853
    %v2918 = vpack.c.b16 %v2856, %v2855
    %v2919 = vpack.c.b16 %v2858, %v2857
    %v2920 = vpack.c.b16 %v2860, %v2859
    %v2921 = vpack.c.b16 %v2862, %v2861
    %v2922 = vpack.c.b16 %v2864, %v2863
    %v2923 = vpack.c.b16 %v2866, %v2865
    %v2924 = vpack.c.b16 %v2868, %v2867
    %v2925 = vpack.c.b16 %v2870, %v2869
    %v2926 = vpack.c.b16 %v2872, %v2871
    %v2927 = vpack.c.b16 %v2874, %v2873
    %v2928 = vpack.c.b16 %v2876, %v2875
    %v2929 = vpack.c.b16 %v2878, %v2877
    %v2930 = vpack.c.b16 %v2880, %v2879
    %v2931 = vpack.c.b16 %v2882, %v2881
    %v2932 = vpack.c.b16 %v2884, %v2883
    %v2933 = vpack.c.b16 %v2886, %v2885
    %v2934 = vpack.c.b16 %v2888, %v2887
    %v2935 = vpack.c.b16 %v2890, %v2889
    %v2936 = vpack.c.b16 %v2892, %v2891
    %v2937 = vpack.c.b16 %v2894, %v2893
    %v2938 = vpack.c.b16 %v2896, %v2895
    %v2939 = vpack.c.b16 %v2898, %v2897
    %v2940 = vpack.c.b16 %v2900, %v2899
    %v2941 = vpack.c.b16 %v2902, %v2901
    %v2942 = vpack.c.b16 %v2904, %v2903
    %v2943 = vpack.c.b16 %v2906, %v2905
    %v2944 = vpack.c.b16 %v2908, %v2907
    %v2945 = vpack.c.b16 %v2910, %v2909
    %v2946 = vpack.c.b16 %v2912, %v2911
    %v2947 = vpack.c.b16 %v2914, %v2913
    %v2948 = vpack.c.b16 %v2916, %v2915
    %2981 = vmatprep.subr.bf16.mxu0 0
    %2982 = vmatpush1.bf16.msra.mxu0 %v2924
    %2983 = vmatprep.subr.bf16.mxu0 0
    %2984 = vmatpush1.bf16.msra.mxu0 %v2923
    %2985 = vmatprep.subr.bf16.mxu0 0
    %2986 = vmatpush1.bf16.msra.mxu0 %v2922
    %2987 = vmatprep.subr.bf16.mxu0 0
    %2988 = vmatpush1.bf16.msra.mxu0 %v2921
    %2989 = vmatprep.subr.bf16.mxu0 0
    %2990 = vmatpush1.bf16.msra.mxu0 %v2920
    %2991 = vmatprep.subr.bf16.mxu0 0
    %2992 = vmatpush1.bf16.msra.mxu0 %v2919
    %2993 = vmatprep.subr.bf16.mxu0 0
    %2994 = vmatpush1.bf16.msra.mxu0 %v2918
    %2995 = vmatprep.subr.bf16.mxu0 0
    %2996 = vmatpush1.bf16.msra.mxu0 %v2917
    %2997 = vmatprep.subr.bf16.mxu0 0
    %2998 = vmatpush2.bf16.msra.mxu0 %v2932
    %2999 = vmatprep.subr.bf16.mxu0 0
    %3000 = vmatpush2.bf16.msra.mxu0 %v2931
    %3001 = vmatprep.subr.bf16.mxu0 0
    %3002 = vmatpush2.bf16.msra.mxu0 %v2930
    %3003 = vmatprep.subr.bf16.mxu0 0
    %3004 = vmatpush2.bf16.msra.mxu0 %v2929
    %3005 = vmatprep.subr.bf16.mxu0 0
    %3006 = vmatpush2.bf16.msra.mxu0 %v2928
    %3007 = vmatprep.subr.bf16.mxu0 0
    %3008 = vmatpush2.bf16.msra.mxu0 %v2927
    %3009 = vmatprep.subr.bf16.mxu0 0
    %3010 = vmatpush2.bf16.msra.mxu0 %v2926
    %3011 = vmatprep.subr.bf16.mxu0 0
    %3012 = vmatpush2.bf16.msra.mxu0 %v2925
    %3013 = vmatprep.mubr.bf16.mxu0 %v2715
    %3014 = vmatmul.mubr.bf16.gmra.mxu0 %v2714
    %v3015 = vpop.f32.mrf.mxu0
    %v3016 = vadd.f32 %v2787, %v3015
    %v3017 = vpop.f32.mrf.mxu0
    %v3018 = vpop.f32.mrf.mxu0
    %v3019 = vpop.f32.mrf.mxu0
    %3020 = vdwg.mxu0
    %3021 = vmatprep.subr.bf16.mxu0 0
    %3022 = vmatpush1.bf16.msra.mxu0 %v2940
    %3023 = vmatprep.subr.bf16.mxu0 0
    %3024 = vmatpush1.bf16.msra.mxu0 %v2939
    %3025 = vmatprep.subr.bf16.mxu0 0
    %3026 = vmatpush1.bf16.msra.mxu0 %v2938
    %3027 = vmatprep.subr.bf16.mxu0 0
    %3028 = vmatpush1.bf16.msra.mxu0 %v2937
    %3029 = vmatprep.subr.bf16.mxu0 0
    %3030 = vmatpush1.bf16.msra.mxu0 %v2936
    %3031 = vmatprep.subr.bf16.mxu0 0
    %3032 = vmatpush1.bf16.msra.mxu0 %v2935
    %3033 = vmatprep.subr.bf16.mxu0 0
    %3034 = vmatpush1.bf16.msra.mxu0 %v2934
    %3035 = vmatprep.subr.bf16.mxu0 0
    %3036 = vmatpush1.bf16.msra.mxu0 %v2933
    %3037 = vmatprep.subr.bf16.mxu0 0
    %3038 = vmatpush2.bf16.msra.mxu0 %v2948
    %3039 = vmatprep.subr.bf16.mxu0 0
    %3040 = vmatpush2.bf16.msra.mxu0 %v2947
    %3041 = vmatprep.subr.bf16.mxu0 0
    %3042 = vmatpush2.bf16.msra.mxu0 %v2946
    %3043 = vmatprep.subr.bf16.mxu0 0
    %3044 = vmatpush2.bf16.msra.mxu0 %v2945
    %3045 = vmatprep.subr.bf16.mxu0 0
    %3046 = vmatpush2.bf16.msra.mxu0 %v2944
    %3047 = vmatprep.subr.bf16.mxu0 0
    %3048 = vmatpush2.bf16.msra.mxu0 %v2943
    %3049 = vmatprep.subr.bf16.mxu0 0
    %3050 = vmatpush2.bf16.msra.mxu0 %v2942
    %3051 = vmatprep.subr.bf16.mxu0 0
    %3052 = vmatpush2.bf16.msra.mxu0 %v2941
    %3053 = vmatprep.mubr.bf16.mxu0 %v2717
    %3054 = vmatmul.mubr.bf16.gmra.mxu0 %v2716
    %v3055 = vpop.f32.mrf.mxu0
    %v3056 = vadd.f32 %v3016, %v3055
    %v3057 = vpop.f32.mrf.mxu0
    %v3058 = vpop.f32.mrf.mxu0
    %v3059 = vpop.f32.mrf.mxu0
    %3060 = vdwg.mxu0
    %3061 = vmax.xlane.f32.xlu0 %v3056
    %v3062 = vpop.xlane.xlu0 %3061
    %v3063 = vsub.f32 %v3056, %v3062
    %v3064 = vmul.f32 %v3063, 1.442695
    %v3065 = vpow.pop %v3064
    %3066 = vadd.xlane.f32.xlu0 %v3065
    %v3067 = vpop.xlane.xlu0 %3066
    %v3068 = vrcp.pop %v3067
    %v3069 = vmul.f32 %v3065, %v3068
    %v3070 = vpack.c.bf16 %v3069, %v3069
    %v3071 = vld [vmem:[#allocation10] sm:$0xf]
    %v3072 = vld [vmem:[#allocation10 + $0x4] sm:$0xf]
    %v3073 = vld [vmem:[#allocation10 + $0x8] sm:$0xf]
    %v3074 = vld [vmem:[#allocation10 + $0xc] sm:$0xf]
    %v3075 = vld [vmem:[#allocation10 + $0x10] sm:$0xf]
    %v3076 = vld [vmem:[#allocation10 + $0x14] sm:$0xf]
    %v3077 = vld [vmem:[#allocation10 + $0x18] sm:$0xf]
    %v3078 = vld [vmem:[#allocation10 + $0x1c] sm:$0xf]
    %v3079 = vld [vmem:[#allocation10 + $0x20] sm:$0xf]
    %v3080 = vld [vmem:[#allocation10 + $0x24] sm:$0xf]
    %v3081 = vld [vmem:[#allocation10 + $0x28] sm:$0xf]
    %v3082 = vld [vmem:[#allocation10 + $0x2c] sm:$0xf]
    %v3083 = vld [vmem:[#allocation10 + $0x30] sm:$0xf]
    %v3084 = vld [vmem:[#allocation10 + $0x34] sm:$0xf]
    %v3085 = vld [vmem:[#allocation10 + $0x38] sm:$0xf]
    %v3086 = vld [vmem:[#allocation10 + $0x3c] sm:$0xf]
    %v3103 = vunpack.c.l.b16 %v3071
    %v3104 = vunpack.c.l.b16 %v3072
    %v3105 = vunpack.c.l.b16 %v3073
    %v3106 = vunpack.c.l.b16 %v3074
    %v3107 = vunpack.c.l.b16 %v3075
    %v3108 = vunpack.c.l.b16 %v3076
    %v3109 = vunpack.c.l.b16 %v3077
    %v3110 = vunpack.c.l.b16 %v3078
    %v3111 = vunpack.c.l.b16 %v3079
    %v3112 = vunpack.c.l.b16 %v3080
    %v3113 = vunpack.c.l.b16 %v3081
    %v3114 = vunpack.c.l.b16 %v3082
    %v3115 = vunpack.c.l.b16 %v3083
    %v3116 = vunpack.c.l.b16 %v3084
    %v3117 = vunpack.c.l.b16 %v3085
    %v3118 = vunpack.c.l.b16 %v3086
    %v3119 = vpack.c.b16 %v3104, %v3103
    %v3120 = vpack.c.b16 %v3106, %v3105
    %v3121 = vpack.c.b16 %v3108, %v3107
    %v3122 = vpack.c.b16 %v3110, %v3109
    %v3123 = vpack.c.b16 %v3112, %v3111
    %v3124 = vpack.c.b16 %v3114, %v3113
    %v3125 = vpack.c.b16 %v3116, %v3115
    %v3126 = vpack.c.b16 %v3118, %v3117
    %3135 = vmatprep.subr.bf16.mxu0 0
    %3136 = vmatpush1.bf16.msra.mxu0 %v3126
    %3137 = vmatprep.subr.bf16.mxu0 0
    %3138 = vmatpush1.bf16.msra.mxu0 %v3125
    %3139 = vmatprep.subr.bf16.mxu0 0
    %3140 = vmatpush1.bf16.msra.mxu0 %v3124
    %3141 = vmatprep.subr.bf16.mxu0 0
    %3142 = vmatpush1.bf16.msra.mxu0 %v3123
    %3143 = vmatprep.subr.bf16.mxu0 0
    %3144 = vmatpush1.bf16.msra.mxu0 %v3122
    %3145 = vmatprep.subr.bf16.mxu0 0
    %3146 = vmatpush1.bf16.msra.mxu0 %v3121
    %3147 = vmatprep.subr.bf16.mxu0 0
    %3148 = vmatpush1.bf16.msra.mxu0 %v3120
    %3149 = vmatprep.subr.bf16.mxu0 0
    %3150 = vmatpush1.bf16.msra.mxu0 %v3119
    %3151 = vmatprep.subr.bf16.mxu0 0
    %3152 = vmatpush2.bf16.msra.mxu0 0
    %3153 = vmatprep.subr.bf16.mxu0 0
    %3154 = vmatpush2.bf16.msra.mxu0 0
    %3155 = vmatprep.subr.bf16.mxu0 0
    %3156 = vmatpush2.bf16.msra.mxu0 0
    %3157 = vmatprep.subr.bf16.mxu0 0
    %3158 = vmatpush2.bf16.msra.mxu0 0
    %3159 = vmatprep.subr.bf16.mxu0 0
    %3160 = vmatpush2.bf16.msra.mxu0 0
    %3161 = vmatprep.subr.bf16.mxu0 0
    %3162 = vmatpush2.bf16.msra.mxu0 0
    %3163 = vmatprep.subr.bf16.mxu0 0
    %3164 = vmatpush2.bf16.msra.mxu0 0
    %3165 = vmatprep.subr.bf16.mxu0 0
    %3166 = vmatpush2.bf16.msra.mxu0 0
    %3167 = vmatprep.mubr.bf16.mxu0 0
    %3168 = vmatmul.mubr.bf16.gmra.mxu0 %v3070
    %v3169 = vpop.f32.mrf.mxu0
    %v3170 = vadd.f32 0.0, %v3169
    %v3171 = vpop.f32.mrf.mxu0
    %v3172 = vpop.f32.mrf.mxu0
    %v3173 = vpop.f32.mrf.mxu0
    %3174 = vdwg.mxu0
    %v3175 = vpack.c.bf16 %v3170, %v3170
    %v3176 = vld [vmem:[#allocation11] sm:$0xf]
    %v3177 = vld [vmem:[#allocation11 + $0x4] sm:$0xf]
    %v3178 = vld [vmem:[#allocation11 + $0x8] sm:$0xf]
    %v3179 = vld [vmem:[#allocation11 + $0xc] sm:$0xf]
    %v3180 = vld [vmem:[#allocation11 + $0x10] sm:$0xf]
    %v3181 = vld [vmem:[#allocation11 + $0x14] sm:$0xf]
    %v3182 = vld [vmem:[#allocation11 + $0x18] sm:$0xf]
    %v3183 = vld [vmem:[#allocation11 + $0x1c] sm:$0xf]
    %v3184 = vld [vmem:[#allocation11 + $0x20] sm:$0xf]
    %v3185 = vld [vmem:[#allocation11 + $0x24] sm:$0xf]
    %v3186 = vld [vmem:[#allocation11 + $0x28] sm:$0xf]
    %v3187 = vld [vmem:[#allocation11 + $0x2c] sm:$0xf]
    %v3188 = vld [vmem:[#allocation11 + $0x30] sm:$0xf]
    %v3189 = vld [vmem:[#allocation11 + $0x34] sm:$0xf]
    %v3190 = vld [vmem:[#allocation11 + $0x38] sm:$0xf]
    %v3191 = vld [vmem:[#allocation11 + $0x3c] sm:$0xf]
    %v3192 = vld [vmem:[%s8] sm:$0x1]
    %v3194 = vlaneseq
    %v3195 = vshrl.u32 %v3194, 7
    %v3196 = vsub.s32 0, %v3195
    %v3197 = vrot.slane %v3192, %v3196
    %v3215 = vunpack.c.l.b16 %v3176
    %v3216 = vunpack.c.l.b16 %v3177
    %v3217 = vunpack.c.l.b16 %v3178
    %v3218 = vunpack.c.l.b16 %v3179
    %v3219 = vunpack.c.l.b16 %v3180
    %v3220 = vunpack.c.l.b16 %v3181
    %v3221 = vunpack.c.l.b16 %v3182
    %v3222 = vunpack.c.l.b16 %v3183
    %v3223 = vunpack.c.l.b16 %v3184
    %v3224 = vunpack.c.l.b16 %v3185
    %v3225 = vunpack.c.l.b16 %v3186
    %v3226 = vunpack.c.l.b16 %v3187
    %v3227 = vunpack.c.l.b16 %v3188
    %v3228 = vunpack.c.l.b16 %v3189
    %v3229 = vunpack.c.l.b16 %v3190
    %v3230 = vunpack.c.l.b16 %v3191
    %v3231 = vpack.c.b16 %v3216, %v3215
    %v3232 = vpack.c.b16 %v3218, %v3217
    %v3233 = vpack.c.b16 %v3220, %v3219
    %v3234 = vpack.c.b16 %v3222, %v3221
    %v3235 = vpack.c.b16 %v3224, %v3223
    %v3236 = vpack.c.b16 %v3226, %v3225
    %v3237 = vpack.c.b16 %v3228, %v3227
    %v3238 = vpack.c.b16 %v3230, %v3229
    %3247 = vmatprep.subr.bf16.mxu0 0
    %3248 = vmatpush1.bf16.msra.mxu0 %v3238
    %3249 = vmatprep.subr.bf16.mxu0 0
    %3250 = vmatpush1.bf16.msra.mxu0 %v3237
    %3251 = vmatprep.subr.bf16.mxu0 0
    %3252 = vmatpush1.bf16.msra.mxu0 %v3236
    %3253 = vmatprep.subr.bf16.mxu0 0
    %3254 = vmatpush1.bf16.msra.mxu0 %v3235
    %3255 = vmatprep.subr.bf16.mxu0 0
    %3256 = vmatpush1.bf16.msra.mxu0 %v3234
    %3257 = vmatprep.subr.bf16.mxu0 0
    %3258 = vmatpush1.bf16.msra.mxu0 %v3233
    %3259 = vmatprep.subr.bf16.mxu0 0
    %3260 = vmatpush1.bf16.msra.mxu0 %v3232
    %3261 = vmatprep.subr.bf16.mxu0 0
    %3262 = vmatpush1.bf16.msra.mxu0 %v3231
    %3263 = vmatprep.subr.bf16.mxu0 0
    %3264 = vmatpush2.bf16.msra.mxu0 0
    %3265 = vmatprep.subr.bf16.mxu0 0
    %3266 = vmatpush2.bf16.msra.mxu0 0
    %3267 = vmatprep.subr.bf16.mxu0 0
    %3268 = vmatpush2.bf16.msra.mxu0 0
    %3269 = vmatprep.subr.bf16.mxu0 0
    %3270 = vmatpush2.bf16.msra.mxu0 0
    %3271 = vmatprep.subr.bf16.mxu0 0
    %3272 = vmatpush2.bf16.msra.mxu0 0
    %3273 = vmatprep.subr.bf16.mxu0 0
    %3274 = vmatpush2.bf16.msra.mxu0 0
    %3275 = vmatprep.subr.bf16.mxu0 0
    %3276 = vmatpush2.bf16.msra.mxu0 0
    %3277 = vmatprep.subr.bf16.mxu0 0
    %3278 = vmatpush2.bf16.msra.mxu0 0
    %3279 = vmatprep.mubr.bf16.mxu0 0
    %3280 = vmatmul.mubr.bf16.gmra.mxu0 %v3175
    %v3281 = vpop.f32.mrf.mxu0
    %v3282 = vadd.f32 %v3197, %v3281
    %v3283 = vpop.f32.mrf.mxu0
    %v3284 = vpop.f32.mrf.mxu0
    %v3285 = vpop.f32.mrf.mxu0
    %3286 = vdwg.mxu0
    %v3287 = vmul.f32 %v3282, %v3282
    %v3288 = vmul.f32 %v3282, %v3287
    %v3289 = vmul.f32 %v3288, 0.044715
    %v3290 = vadd.f32 %v3282, %v3289
    %v3291 = vmul.f32 %v3290, 0.7978846
    %v3292 = vtanh.pop %v3291
    %v3293 = vadd.f32 %v3292, 1.0
    %v3294 = vmul.f32 %v3293, 0.5
    %v3295 = vmul.f32 %v3282, %v3294
    %v3296 = vpack.c.bf16 %v3295, %v3295
    %v3297 = vld [vmem:[#allocation13] sm:$0xf]
    %v3298 = vld [vmem:[#allocation13 + $0x4] sm:$0xf]
    %v3299 = vld [vmem:[#allocation13 + $0x8] sm:$0xf]
    %v3300 = vld [vmem:[#allocation13 + $0xc] sm:$0xf]
    %v3301 = vld [vmem:[#allocation13 + $0x10] sm:$0xf]
    %v3302 = vld [vmem:[#allocation13 + $0x14] sm:$0xf]
    %v3303 = vld [vmem:[#allocation13 + $0x18] sm:$0xf]
    %v3304 = vld [vmem:[#allocation13 + $0x1c] sm:$0xf]
    %v3305 = vld [vmem:[#allocation13 + $0x20] sm:$0xf]
    %v3306 = vld [vmem:[#allocation13 + $0x24] sm:$0xf]
    %v3307 = vld [vmem:[#allocation13 + $0x28] sm:$0xf]
    %v3308 = vld [vmem:[#allocation13 + $0x2c] sm:$0xf]
    %v3309 = vld [vmem:[#allocation13 + $0x30] sm:$0xf]
    %v3310 = vld [vmem:[#allocation13 + $0x34] sm:$0xf]
    %v3311 = vld [vmem:[#allocation13 + $0x38] sm:$0xf]
    %v3312 = vld [vmem:[#allocation13 + $0x3c] sm:$0xf]
    %v3313 = vld [vmem:[%s10] sm:$0x1]
    %v3315 = vlaneseq
    %v3316 = vshrl.u32 %v3315, 7
    %v3317 = vsub.s32 0, %v3316
    %v3318 = vrot.slane %v3313, %v3317
    %v3336 = vunpack.c.l.b16 %v3297
    %v3337 = vunpack.c.l.b16 %v3298
    %v3338 = vunpack.c.l.b16 %v3299
    %v3339 = vunpack.c.l.b16 %v3300
    %v3340 = vunpack.c.l.b16 %v3301
    %v3341 = vunpack.c.l.b16 %v3302
    %v3342 = vunpack.c.l.b16 %v3303
    %v3343 = vunpack.c.l.b16 %v3304
    %v3344 = vunpack.c.l.b16 %v3305
    %v3345 = vunpack.c.l.b16 %v3306
    %v3346 = vunpack.c.l.b16 %v3307
    %v3347 = vunpack.c.l.b16 %v3308
    %v3348 = vunpack.c.l.b16 %v3309
    %v3349 = vunpack.c.l.b16 %v3310
    %v3350 = vunpack.c.l.b16 %v3311
    %v3351 = vunpack.c.l.b16 %v3312
    %v3352 = vpack.c.b16 %v3337, %v3336
    %v3353 = vpack.c.b16 %v3339, %v3338
    %v3354 = vpack.c.b16 %v3341, %v3340
    %v3355 = vpack.c.b16 %v3343, %v3342
    %v3356 = vpack.c.b16 %v3345, %v3344
    %v3357 = vpack.c.b16 %v3347, %v3346
    %v3358 = vpack.c.b16 %v3349, %v3348
    %v3359 = vpack.c.b16 %v3351, %v3350
    %3368 = vmatprep.subr.bf16.mxu0 0
    %3369 = vmatpush1.bf16.msra.mxu0 %v3359
    %3370 = vmatprep.subr.bf16.mxu0 0
    %3371 = vmatpush1.bf16.msra.mxu0 %v3358
    %3372 = vmatprep.subr.bf16.mxu0 0
    %3373 = vmatpush1.bf16.msra.mxu0 %v3357
    %3374 = vmatprep.subr.bf16.mxu0 0
    %3375 = vmatpush1.bf16.msra.mxu0 %v3356
    %3376 = vmatprep.subr.bf16.mxu0 0
    %3377 = vmatpush1.bf16.msra.mxu0 %v3355
    %3378 = vmatprep.subr.bf16.mxu0 0
    %3379 = vmatpush1.bf16.msra.mxu0 %v3354
    %3380 = vmatprep.subr.bf16.mxu0 0
    %3381 = vmatpush1.bf16.msra.mxu0 %v3353
    %3382 = vmatprep.subr.bf16.mxu0 0
    %3383 = vmatpush1.bf16.msra.mxu0 %v3352
    %3384 = vmatprep.subr.bf16.mxu0 0
    %3385 = vmatpush2.bf16.msra.mxu0 0
    %3386 = vmatprep.subr.bf16.mxu0 0
    %3387 = vmatpush2.bf16.msra.mxu0 0
    %3388 = vmatprep.subr.bf16.mxu0 0
    %3389 = vmatpush2.bf16.msra.mxu0 0
    %3390 = vmatprep.subr.bf16.mxu0 0
    %3391 = vmatpush2.bf16.msra.mxu0 0
    %3392 = vmatprep.subr.bf16.mxu0 0
    %3393 = vmatpush2.bf16.msra.mxu0 0
    %3394 = vmatprep.subr.bf16.mxu0 0
    %3395 = vmatpush2.bf16.msra.mxu0 0
    %3396 = vmatprep.subr.bf16.mxu0 0
    %3397 = vmatpush2.bf16.msra.mxu0 0
    %3398 = vmatprep.subr.bf16.mxu0 0
    %3399 = vmatpush2.bf16.msra.mxu0 0
    %3400 = vmatprep.mubr.bf16.mxu0 0
    %3401 = vmatmul.mubr.bf16.gmra.mxu0 %v3296
    %v3402 = vpop.f32.mrf.mxu0
    %v3403 = vadd.f32 %v3318, %v3402
    %v3404 = vpop.f32.mrf.mxu0
    %v3405 = vpop.f32.mrf.mxu0
    %v3406 = vpop.f32.mrf.mxu0
    %3407 = vdwg.mxu0
    %v3408 = vld [vmem:[%s11] sm:$0x1]
    %v3410 = vlaneseq
    %v3411 = vshrl.u32 %v3410, 7
    %v3412 = vsub.s32 0, %v3411
    %v3413 = vrot.slane %v3408, %v3412
    %v3415 = vmul.f32 %v3413, %v3403
    %v3416 = vadd.f32 %v3170, %v3415
    %3417 = vst [vmem:[#allocation14] sm:$0xff] %v3416
    // Predicated region
    $region78: #{tpu_custom_call.1} parent=1 // pred_check
      _
    $region79: #{tpu_custom_call.1} parent=1 // pred_check_branch
      %3419 = sbr.rel (0) target = $region81
    $region80: #{tpu_custom_call.1} parent=1 // pred_region
      %s3421 = ssub.s32 128, 128
      %3422 = vsyncadd [#allocation4], %s3421
      %s3424 = sshll.u32 [#allocation14], 4
      %s3425 = int_to_ptr.vmem [resolvable:$true] %s3424
      %3427 = dma.vmem_to_hbm [thread:$0]  %s3425, 128, %s12, [#allocation4]
    $region81: #{tpu_custom_call.1} parent=1 // pred_fallthru
      _
    // Predicated region
    $region82: #{tpu_custom_call.1} parent=1 // pred_check
      _
    $region83: #{tpu_custom_call.1} parent=1 // pred_check_branch
      %3429 = sbr.rel (0) target = $region85
    $region84: #{tpu_custom_call.1} parent=1 // pred_region
      %3430 = dma.done [#allocation4], 128
    $region85: #{tpu_custom_call.1} parent=1 // pred_fallthru
      _
    %3431 = vsyncpa [#allocation3], 1
    %3432 = vsyncpa [#allocation6], 1
    %3433 = vsyncpa [#allocation9], 1
    %3434 = vsyncpa [#allocation12], 1
    %3435 = vsyncpa [#allocation4], 1

</llo_original>
